<compile_context>
chip_gen: v7x
topology: tpu7x:2x2x1
jax: 0.10.0
libtpu: 0.0.40
codegen_flags: <defaults>
</compile_context>

<pallas_src>
import numpy as np
import jax
import jax.numpy as jnp
from jax import lax
from jax.experimental import pallas as pl
from jax.experimental.pallas import tpu as pltpu

# ---- configuration (mirrors IncentiveConv.__init__ hyper-parameters) -------
BATCH = 2
IN_CH = 3                     # Conv2d(3, ...) -- fixed by the module
OBS_H, OBS_W = 16, 16         # scheme['obs_dims']['vshape']
N_FILTERS = 4                 # args_alg['n_filters']
KERNEL = (3, 3)               # args_alg['kernel']
STRIDE = 1                    # args_alg['stride'] (module's Linear sizing assumes 1)
INC_H1 = 32                   # args_alg['inc_h1']
INC_H2 = 32                   # args_alg['inc_h2']
NUM_AGENTS = 3
N_ACTIONS = 5                 # scheme['avail_actions']['vshape'][0]
OTHER_ACTION_1HOT = False
OTHER_ACTION_SHAPE = ((NUM_AGENTS - 1) * N_ACTIONS if OTHER_ACTION_1HOT
                      else NUM_AGENTS - 1)

KH, KW = KERNEL
OUT_H = (OBS_H - KH) // STRIDE + 1
OUT_W = (OBS_W - KW) // STRIDE + 1
P_VALID = OUT_H * OUT_W                 # 196 valid conv positions
HW = OBS_H * OBS_W                      # 256 = lane-dense spatial axis used in-kernel
FLAT = N_FILTERS * P_VALID              # nn.Flatten() size (C,H,W order)
N_TAP_SPATIAL = KH * KW                 # 9 spatial taps (im2col via rolls)


def _align8(n):
    return ((n + 7) // 8) * 8


# ---- "smalls" parameter slab layout (one [PRM_ROWS, 128] f32 VMEM input) ----
WK_ROWS = BATCH * N_FILTERS             # 8 conv-output rows (c-major, b-minor)
WK_STRIDE = _align8(WK_ROWS)
R_WK = 0                                             # 9 block-diag conv blocks [8, B*IN_CH]
R_BCONV = R_WK + N_TAP_SPATIAL * WK_STRIDE           # conv bias, broadcast per row  [8, 1]
R_W1X = _align8(R_BCONV + WK_ROWS)                   # fc1 weight (h1 part)   [INC_H1, INC_H2]
R_W1A = _align8(R_W1X + INC_H1)                      # fc1 weight (actions)   [A, INC_H2]
R_B1 = _align8(R_W1A + OTHER_ACTION_SHAPE)           # fc1 bias               [1, INC_H2]
R_BFC = _align8(R_B1 + 1)                            # conv->fc bias          [1, INC_H1]
R_W2 = _align8(R_BFC + 1)                            # fc2 weight             [INC_H2, NUM_AGENTS]
R_B2 = _align8(R_W2 + INC_H2)                        # fc2 bias               [1, NUM_AGENTS]
PRM_ROWS = _align8(R_B2 + 1)
PRM_COLS = 128


def _tree_sum(parts):
    """Balanced-tree reduction so independent MXU results don't serialize."""
    parts = list(parts)
    while len(parts) > 1:
        nxt = [parts[i] + parts[i + 1] for i in range(0, len(parts) - 1, 2)]
        if len(parts) % 2:
            nxt.append(parts[-1])
        parts = nxt
    return parts[0]


# --------------------- fused kernel: conv + ReLU + MLP head ------------------
def _incentive_fused_kernel(x_ref, act_ref, prm_ref, wfc_ref, o_ref):
    # x_ref:   [BATCH*IN_CH, HW]        flattened obs, lane-dense (row = b*IN_CH + ci)
    # act_ref: [BATCH, OTHER_ACTION_SHAPE]
    # prm_ref: [PRM_ROWS, 128]          packed small params (see layout above)
    # wfc_ref: [N_FILTERS, INC_H1, HW]  fc weight per conv filter, lane-dense,
    #                                   zeroed at invalid spatial positions
    x = x_ref[...]                                        # [B*C, 256]

    # ---- conv via in-kernel im2col: one pltpu.roll + one block-diag matmul per tap
    conv_parts = []
    for k in range(N_TAP_SPATIAL):
        kh, kw = divmod(k, KW)
        s = kh * OBS_W + kw
        xs = x if s == 0 else pltpu.roll(x, (HW - s) % HW, 1)   # xs[:, q] = x[:, q+s]
        wk = prm_ref[R_WK + k * WK_STRIDE:R_WK + k * WK_STRIDE + WK_ROWS,
                     0:BATCH * IN_CH]                     # [B*NF, B*C] block-diag over batch
        conv_parts.append(jnp.dot(wk, xs, preferred_element_type=jnp.float32))
    conv = _tree_sum(conv_parts)                          # [B*NF, 256], row = c*B + b
    conv = conv + prm_ref[R_BCONV:R_BCONV + WK_ROWS, 0:1]
    conv = jnp.maximum(conv, 0.0)
    # invalid lanes (wrap-around windows / ow,oh >= 14) hold finite garbage; the
    # corresponding rows of wfc are zero, so they contribute nothing below.

    # ---- Linear(FLAT, INC_H1): independent per-filter contractions, tree-reduced
    fc_parts = []
    for c in range(N_FILTERS):
        conv_c = conv[c * BATCH:(c + 1) * BATCH, :]       # [B, 256]
        fc_parts.append(lax.dot_general(
            conv_c, wfc_ref[c],                           # [B,256] x [INC_H1,256] (A @ B^T)
            (((1,), (1,)), ((), ())),
            preferred_element_type=jnp.float32))
    h1 = _tree_sum(fc_parts) + prm_ref[R_BFC:R_BFC + 1, 0:INC_H1]
    h1 = jnp.maximum(h1, 0.0)                             # [B, INC_H1]

    # ---- concat([h1, actions]) @ W1.T == h1 @ W1x + actions @ W1a (split weight)
    act = act_ref[...]                                    # [B, A]
    h2 = (jnp.dot(h1, prm_ref[R_W1X:R_W1X + INC_H1, 0:INC_H2],
                  preferred_element_type=jnp.float32)
          + jnp.dot(act, prm_ref[R_W1A:R_W1A + OTHER_ACTION_SHAPE, 0:INC_H2],
                    preferred_element_type=jnp.float32)
          + prm_ref[R_B1:R_B1 + 1, 0:INC_H2])
    h2 = jnp.maximum(h2, 0.0)                             # [B, INC_H2]

    logits = (jnp.dot(h2, prm_ref[R_W2:R_W2 + INC_H2, 0:NUM_AGENTS],
                      preferred_element_type=jnp.float32)
              + prm_ref[R_B2:R_B2 + 1, 0:NUM_AGENTS])
    o_ref[...] = jax.nn.sigmoid(logits)                   # single whole-ref store


# --------------------------- parameter preparation ---------------------------
def prepare_params(p):
    """One-time rearrangement of PyTorch-layout params into the 2 kernel slabs."""
    wconv = np.asarray(p['conv_w'], np.float32)           # [NF, C, KH, KW]
    prm = np.zeros((PRM_ROWS, PRM_COLS), np.float32)

    # 9 block-diagonal batched conv blocks: Wk[c*B + b, b*C + ci] = wconv[c, ci, kh, kw]
    for k in range(N_TAP_SPATIAL):
        kh, kw = divmod(k, KW)
        base = R_WK + k * WK_STRIDE
        for c in range(N_FILTERS):
            for b in range(BATCH):
                prm[base + c * BATCH + b, b * IN_CH:(b + 1) * IN_CH] = wconv[c, :, kh, kw]

    bconv = np.asarray(p['conv_b'], np.float32)
    for c in range(N_FILTERS):
        for b in range(BATCH):
            prm[R_BCONV + c * BATCH + b, 0] = bconv[c]

    w1 = np.asarray(p['w1'], np.float32)                  # [INC_H2, INC_H1 + A]
    prm[R_W1X:R_W1X + INC_H1, :INC_H2] = w1[:, :INC_H1].T
    prm[R_W1A:R_W1A + OTHER_ACTION_SHAPE, :INC_H2] = w1[:, INC_H1:].T
    prm[R_B1, :INC_H2] = np.asarray(p['b1'], np.float32)
    prm[R_BFC, :INC_H1] = np.asarray(p['bfc'], np.float32)
    w2 = np.asarray(p['w2'], np.float32)                  # [NUM_AGENTS, INC_H2]
    prm[R_W2:R_W2 + INC_H2, :NUM_AGENTS] = w2.T
    prm[R_B2, :NUM_AGENTS] = np.asarray(p['b2'], np.float32)

    # fc weight: [INC_H1, FLAT] (flat = c*196 + oh*14 + ow, PyTorch (c,h,w) flatten)
    # -> [NF, INC_H1, HW=256] placed at q = oh*STRIDE*16 + ow*STRIDE, zero elsewhere
    # (zeros kill the invalid / wrap-around conv lanes produced by the in-kernel rolls).
    wfc = np.asarray(p['wfc'], np.float32).reshape(INC_H1, N_FILTERS, OUT_H, OUT_W)
    wfc_grid = np.zeros((N_FILTERS, INC_H1, OBS_H, OBS_W), np.float32)
    wfc_grid[:, :, 0:OUT_H * STRIDE:STRIDE, 0:OUT_W * STRIDE:STRIDE] = \
        np.transpose(wfc, (1, 0, 2, 3))
    wfc_k = wfc_grid.reshape(N_FILTERS, INC_H1, HW)

    return {'prm': jnp.asarray(prm), 'wfc': jnp.asarray(wfc_k)}


# ------------------------------- wrapper -------------------------------------
@jax.jit
def incentive_conv_forward(inputs, actions, kp):
    # [B, C, H, W] -> [B*C, H*W]: contiguous reshape, free in XLA (no im2col here).
    x = inputs.reshape(BATCH * IN_CH, HW)
    return pl.pallas_call(
        _incentive_fused_kernel,
        out_shape=jax.ShapeDtypeStruct((BATCH, NUM_AGENTS), jnp.float32),
        in_specs=[pl.BlockSpec(memory_space=pltpu.MemorySpace.VMEM)] * 4,
        out_specs=pl.BlockSpec(memory_space=pltpu.MemorySpace.VMEM),
    )(x, actions, kp['prm'], kp['wfc'])


# ------------------------- pure-JAX reference --------------------------------
def reference_forward(inputs, actions, p):
    conv = lax.conv_general_dilated(
        inputs, p['conv_w'], window_strides=(STRIDE, STRIDE), padding='VALID',
        dimension_numbers=('NCHW', 'OIHW', 'NCHW'))
    conv = jax.nn.relu(conv + p['conv_b'][None, :, None, None])
    flat = conv.reshape(BATCH, -1)
    h1 = jax.nn.relu(flat @ p['wfc'].T + p['bfc'])
    x = jnp.concatenate([h1, actions], axis=-1)
    h2 = jax.nn.relu(x @ p['w1'].T + p['b1'])
    return jax.nn.sigmoid(h2 @ p['w2'].T + p['b2'])


if __name__ == "__main__":
    key = jax.random.PRNGKey(0)
    ks = jax.random.split(key, 10)
    params = {
        'conv_w': 0.1 * jax.random.normal(ks[0], (N_FILTERS, IN_CH, KH, KW), jnp.float32),
        'conv_b': 0.1 * jax.random.normal(ks[1], (N_FILTERS,), jnp.float32),
        'wfc':    0.05 * jax.random.normal(ks[2], (INC_H1, FLAT), jnp.float32),
        'bfc':    0.1 * jax.random.normal(ks[3], (INC_H1,), jnp.float32),
        'w1':     0.1 * jax.random.normal(ks[4], (INC_H2, INC_H1 + OTHER_ACTION_SHAPE), jnp.float32),
        'b1':     0.1 * jax.random.normal(ks[5], (INC_H2,), jnp.float32),
        'w2':     0.1 * jax.random.normal(ks[6], (NUM_AGENTS, INC_H2), jnp.float32),
        'b2':     0.1 * jax.random.normal(ks[7], (NUM_AGENTS,), jnp.float32),
    }
    inputs = jax.random.normal(ks[8], (BATCH, IN_CH, OBS_H, OBS_W), jnp.float32)
    actions = jax.random.normal(ks[9], (BATCH, OTHER_ACTION_SHAPE), jnp.float32)

    kernel_params = prepare_params(params)   # one-time layout prep (not per call)

    out = incentive_conv_forward(inputs, actions, kernel_params)
    out = jax.block_until_ready(out)

    ref = reference_forward(inputs, actions, params)
    assert out.shape == (BATCH, NUM_AGENTS)
    assert jnp.allclose(out, ref, rtol=1e-3, atol=1e-3), (out, ref)
    print("KERNEL_OK")
</pallas_src>

<mosaic_0001>
module attributes {stable_mosaic.version = 11 : i64} {
  func.func @_incentive_fused_kernel(%arg0: memref<6x256xf32, #tpu.memory_space<vmem>>, %arg1: memref<2x2xf32, #tpu.memory_space<vmem>>, %arg2: memref<176x128xf32, #tpu.memory_space<vmem>>, %arg3: memref<4x32x256xf32, #tpu.memory_space<vmem>>, %arg4: memref<2x3xf32, #tpu.memory_space<vmem>>) attributes {dimension_semantics = [], scalar_prefetch = 0 : i64, scratch_operands = 0 : i64, tpu.core_type = #tpu.core_type<tc>} {
    %c0 = arith.constant 0 : index
    %c0_0 = arith.constant 0 : index
    %0 = vector.load %arg0[%c0, %c0_0] : memref<6x256xf32, #tpu.memory_space<vmem>>, vector<6x256xf32>
    %c0_1 = arith.constant 0 : index
    %c0_2 = arith.constant 0 : index
    %1 = vector.load %arg2[%c0_1, %c0_2] : memref<176x128xf32, #tpu.memory_space<vmem>>, vector<8x6xf32>
    %cst = arith.constant dense<0.000000e+00> : vector<8x256xf32>
    %2 = tpu.matmul %1, %0, %cst {dimension_numbers = #tpu.dot_dimension_numbers<[1], [0], [0], [1], [0, 0, 1, 1], [], []>} : vector<8x6xf32>, vector<6x256xf32>, vector<8x256xf32> -> vector<8x256xf32>
    %c255_i32 = arith.constant 255 : i32
    %3 = tpu.dynamic_rotate %0 by %c255_i32 dim 1 : vector<6x256xf32>, i32 -> vector<6x256xf32>
    %c8 = arith.constant 8 : index
    %c0_3 = arith.constant 0 : index
    %4 = vector.load %arg2[%c8, %c0_3] : memref<176x128xf32, #tpu.memory_space<vmem>>, vector<8x6xf32>
    %cst_4 = arith.constant dense<0.000000e+00> : vector<8x256xf32>
    %5 = tpu.matmul %4, %3, %cst_4 {dimension_numbers = #tpu.dot_dimension_numbers<[1], [0], [0], [1], [0, 0, 1, 1], [], []>} : vector<8x6xf32>, vector<6x256xf32>, vector<8x256xf32> -> vector<8x256xf32>
    %c254_i32 = arith.constant 254 : i32
    %6 = tpu.dynamic_rotate %0 by %c254_i32 dim 1 : vector<6x256xf32>, i32 -> vector<6x256xf32>
    %c16 = arith.constant 16 : index
    %c0_5 = arith.constant 0 : index
    %7 = vector.load %arg2[%c16, %c0_5] : memref<176x128xf32, #tpu.memory_space<vmem>>, vector<8x6xf32>
    %cst_6 = arith.constant dense<0.000000e+00> : vector<8x256xf32>
    %8 = tpu.matmul %7, %6, %cst_6 {dimension_numbers = #tpu.dot_dimension_numbers<[1], [0], [0], [1], [0, 0, 1, 1], [], []>} : vector<8x6xf32>, vector<6x256xf32>, vector<8x256xf32> -> vector<8x256xf32>
    %c240_i32 = arith.constant 240 : i32
    %9 = tpu.dynamic_rotate %0 by %c240_i32 dim 1 : vector<6x256xf32>, i32 -> vector<6x256xf32>
    %c24 = arith.constant 24 : index
    %c0_7 = arith.constant 0 : index
    %10 = vector.load %arg2[%c24, %c0_7] : memref<176x128xf32, #tpu.memory_space<vmem>>, vector<8x6xf32>
    %cst_8 = arith.constant dense<0.000000e+00> : vector<8x256xf32>
    %11 = tpu.matmul %10, %9, %cst_8 {dimension_numbers = #tpu.dot_dimension_numbers<[1], [0], [0], [1], [0, 0, 1, 1], [], []>} : vector<8x6xf32>, vector<6x256xf32>, vector<8x256xf32> -> vector<8x256xf32>
    %c239_i32 = arith.constant 239 : i32
    %12 = tpu.dynamic_rotate %0 by %c239_i32 dim 1 : vector<6x256xf32>, i32 -> vector<6x256xf32>
    %c32 = arith.constant 32 : index
    %c0_9 = arith.constant 0 : index
    %13 = vector.load %arg2[%c32, %c0_9] : memref<176x128xf32, #tpu.memory_space<vmem>>, vector<8x6xf32>
    %cst_10 = arith.constant dense<0.000000e+00> : vector<8x256xf32>
    %14 = tpu.matmul %13, %12, %cst_10 {dimension_numbers = #tpu.dot_dimension_numbers<[1], [0], [0], [1], [0, 0, 1, 1], [], []>} : vector<8x6xf32>, vector<6x256xf32>, vector<8x256xf32> -> vector<8x256xf32>
    %c238_i32 = arith.constant 238 : i32
    %15 = tpu.dynamic_rotate %0 by %c238_i32 dim 1 : vector<6x256xf32>, i32 -> vector<6x256xf32>
    %c40 = arith.constant 40 : index
    %c0_11 = arith.constant 0 : index
    %16 = vector.load %arg2[%c40, %c0_11] : memref<176x128xf32, #tpu.memory_space<vmem>>, vector<8x6xf32>
    %cst_12 = arith.constant dense<0.000000e+00> : vector<8x256xf32>
    %17 = tpu.matmul %16, %15, %cst_12 {dimension_numbers = #tpu.dot_dimension_numbers<[1], [0], [0], [1], [0, 0, 1, 1], [], []>} : vector<8x6xf32>, vector<6x256xf32>, vector<8x256xf32> -> vector<8x256xf32>
    %c224_i32 = arith.constant 224 : i32
    %18 = tpu.dynamic_rotate %0 by %c224_i32 dim 1 : vector<6x256xf32>, i32 -> vector<6x256xf32>
    %c48 = arith.constant 48 : index
    %c0_13 = arith.constant 0 : index
    %19 = vector.load %arg2[%c48, %c0_13] : memref<176x128xf32, #tpu.memory_space<vmem>>, vector<8x6xf32>
    %cst_14 = arith.constant dense<0.000000e+00> : vector<8x256xf32>
    %20 = tpu.matmul %19, %18, %cst_14 {dimension_numbers = #tpu.dot_dimension_numbers<[1], [0], [0], [1], [0, 0, 1, 1], [], []>} : vector<8x6xf32>, vector<6x256xf32>, vector<8x256xf32> -> vector<8x256xf32>
    %c223_i32 = arith.constant 223 : i32
    %21 = tpu.dynamic_rotate %0 by %c223_i32 dim 1 : vector<6x256xf32>, i32 -> vector<6x256xf32>
    %c56 = arith.constant 56 : index
    %c0_15 = arith.constant 0 : index
    %22 = vector.load %arg2[%c56, %c0_15] : memref<176x128xf32, #tpu.memory_space<vmem>>, vector<8x6xf32>
    %cst_16 = arith.constant dense<0.000000e+00> : vector<8x256xf32>
    %23 = tpu.matmul %22, %21, %cst_16 {dimension_numbers = #tpu.dot_dimension_numbers<[1], [0], [0], [1], [0, 0, 1, 1], [], []>} : vector<8x6xf32>, vector<6x256xf32>, vector<8x256xf32> -> vector<8x256xf32>
    %c222_i32 = arith.constant 222 : i32
    %24 = tpu.dynamic_rotate %0 by %c222_i32 dim 1 : vector<6x256xf32>, i32 -> vector<6x256xf32>
    %c64 = arith.constant 64 : index
    %c0_17 = arith.constant 0 : index
    %25 = vector.load %arg2[%c64, %c0_17] : memref<176x128xf32, #tpu.memory_space<vmem>>, vector<8x6xf32>
    %cst_18 = arith.constant dense<0.000000e+00> : vector<8x256xf32>
    %26 = tpu.matmul %25, %24, %cst_18 {dimension_numbers = #tpu.dot_dimension_numbers<[1], [0], [0], [1], [0, 0, 1, 1], [], []>} : vector<8x6xf32>, vector<6x256xf32>, vector<8x256xf32> -> vector<8x256xf32>
    %27 = arith.addf %2, %5 : vector<8x256xf32>
    %28 = arith.addf %8, %11 : vector<8x256xf32>
    %29 = arith.addf %14, %17 : vector<8x256xf32>
    %30 = arith.addf %20, %23 : vector<8x256xf32>
    %31 = arith.addf %27, %28 : vector<8x256xf32>
    %32 = arith.addf %29, %30 : vector<8x256xf32>
    %33 = arith.addf %31, %32 : vector<8x256xf32>
    %34 = arith.addf %33, %26 : vector<8x256xf32>
    %c72 = arith.constant 72 : index
    %c0_19 = arith.constant 0 : index
    %35 = vector.load %arg2[%c72, %c0_19] : memref<176x128xf32, #tpu.memory_space<vmem>>, vector<8x1xf32>
    %36 = vector.broadcast %35 : vector<8x1xf32> to vector<8x256xf32>
    %37 = arith.addf %34, %36 : vector<8x256xf32>
    %cst_20 = arith.constant 0.000000e+00 : f32
    %38 = vector.broadcast %cst_20 : f32 to vector<8x256xf32>
    %39 = arith.maximumf %37, %38 : vector<8x256xf32>
    %40 = vector.extract_strided_slice %39 {offsets = [0, 0], sizes = [2, 256], strides = [1, 1]} : vector<8x256xf32> to vector<2x256xf32>
    %c0_21 = arith.constant 0 : index
    %c0_22 = arith.constant 0 : index
    %c0_23 = arith.constant 0 : index
    %41 = vector.load %arg3[%c0_21, %c0_22, %c0_23] : memref<4x32x256xf32, #tpu.memory_space<vmem>>, vector<1x32x256xf32>
    %42 = vector.shape_cast %41 : vector<1x32x256xf32> to vector<32x256xf32>
    %cst_24 = arith.constant dense<0.000000e+00> : vector<2x32xf32>
    %43 = tpu.matmul %40, %42, %cst_24 {dimension_numbers = #tpu.dot_dimension_numbers<[1], [1], [0], [0], [0, 0, 1, 0], [], []>} : vector<2x256xf32>, vector<32x256xf32>, vector<2x32xf32> -> vector<2x32xf32>
    %44 = vector.extract_strided_slice %39 {offsets = [2, 0], sizes = [2, 256], strides = [1, 1]} : vector<8x256xf32> to vector<2x256xf32>
    %c1 = arith.constant 1 : index
    %c0_25 = arith.constant 0 : index
    %c0_26 = arith.constant 0 : index
    %45 = vector.load %arg3[%c1, %c0_25, %c0_26] : memref<4x32x256xf32, #tpu.memory_space<vmem>>, vector<1x32x256xf32>
    %46 = vector.shape_cast %45 : vector<1x32x256xf32> to vector<32x256xf32>
    %cst_27 = arith.constant dense<0.000000e+00> : vector<2x32xf32>
    %47 = tpu.matmul %44, %46, %cst_27 {dimension_numbers = #tpu.dot_dimension_numbers<[1], [1], [0], [0], [0, 0, 1, 0], [], []>} : vector<2x256xf32>, vector<32x256xf32>, vector<2x32xf32> -> vector<2x32xf32>
    %48 = vector.extract_strided_slice %39 {offsets = [4, 0], sizes = [2, 256], strides = [1, 1]} : vector<8x256xf32> to vector<2x256xf32>
    %c2 = arith.constant 2 : index
    %c0_28 = arith.constant 0 : index
    %c0_29 = arith.constant 0 : index
    %49 = vector.load %arg3[%c2, %c0_28, %c0_29] : memref<4x32x256xf32, #tpu.memory_space<vmem>>, vector<1x32x256xf32>
    %50 = vector.shape_cast %49 : vector<1x32x256xf32> to vector<32x256xf32>
    %cst_30 = arith.constant dense<0.000000e+00> : vector<2x32xf32>
    %51 = tpu.matmul %48, %50, %cst_30 {dimension_numbers = #tpu.dot_dimension_numbers<[1], [1], [0], [0], [0, 0, 1, 0], [], []>} : vector<2x256xf32>, vector<32x256xf32>, vector<2x32xf32> -> vector<2x32xf32>
    %52 = vector.extract_strided_slice %39 {offsets = [6, 0], sizes = [2, 256], strides = [1, 1]} : vector<8x256xf32> to vector<2x256xf32>
    %c3 = arith.constant 3 : index
    %c0_31 = arith.constant 0 : index
    %c0_32 = arith.constant 0 : index
    %53 = vector.load %arg3[%c3, %c0_31, %c0_32] : memref<4x32x256xf32, #tpu.memory_space<vmem>>, vector<1x32x256xf32>
    %54 = vector.shape_cast %53 : vector<1x32x256xf32> to vector<32x256xf32>
    %cst_33 = arith.constant dense<0.000000e+00> : vector<2x32xf32>
    %55 = tpu.matmul %52, %54, %cst_33 {dimension_numbers = #tpu.dot_dimension_numbers<[1], [1], [0], [0], [0, 0, 1, 0], [], []>} : vector<2x256xf32>, vector<32x256xf32>, vector<2x32xf32> -> vector<2x32xf32>
    %56 = arith.addf %43, %47 : vector<2x32xf32>
    %57 = arith.addf %51, %55 : vector<2x32xf32>
    %58 = arith.addf %56, %57 : vector<2x32xf32>
    %c128 = arith.constant 128 : index
    %c0_34 = arith.constant 0 : index
    %59 = vector.load %arg2[%c128, %c0_34] : memref<176x128xf32, #tpu.memory_space<vmem>>, vector<1x32xf32>
    %60 = vector.broadcast %59 : vector<1x32xf32> to vector<2x32xf32>
    %61 = arith.addf %58, %60 : vector<2x32xf32>
    %cst_35 = arith.constant 0.000000e+00 : f32
    %62 = vector.broadcast %cst_35 : f32 to vector<2x32xf32>
    %63 = arith.maximumf %61, %62 : vector<2x32xf32>
    %c0_36 = arith.constant 0 : index
    %c0_37 = arith.constant 0 : index
    %64 = vector.load %arg1[%c0_36, %c0_37] : memref<2x2xf32, #tpu.memory_space<vmem>>, vector<2x2xf32>
    %c80 = arith.constant 80 : index
    %c0_38 = arith.constant 0 : index
    %65 = vector.load %arg2[%c80, %c0_38] : memref<176x128xf32, #tpu.memory_space<vmem>>, vector<32x32xf32>
    %cst_39 = arith.constant dense<0.000000e+00> : vector<2x32xf32>
    %66 = tpu.matmul %63, %65, %cst_39 {dimension_numbers = #tpu.dot_dimension_numbers<[1], [0], [0], [1], [0, 0, 1, 1], [], []>} : vector<2x32xf32>, vector<32x32xf32>, vector<2x32xf32> -> vector<2x32xf32>
    %c112 = arith.constant 112 : index
    %c0_40 = arith.constant 0 : index
    %67 = vector.load %arg2[%c112, %c0_40] : memref<176x128xf32, #tpu.memory_space<vmem>>, vector<2x32xf32>
    %cst_41 = arith.constant dense<0.000000e+00> : vector<2x32xf32>
    %68 = tpu.matmul %64, %67, %cst_41 {dimension_numbers = #tpu.dot_dimension_numbers<[1], [0], [0], [1], [0, 0, 1, 1], [], []>} : vector<2x2xf32>, vector<2x32xf32>, vector<2x32xf32> -> vector<2x32xf32>
    %69 = arith.addf %66, %68 : vector<2x32xf32>
    %c120 = arith.constant 120 : index
    %c0_42 = arith.constant 0 : index
    %70 = vector.load %arg2[%c120, %c0_42] : memref<176x128xf32, #tpu.memory_space<vmem>>, vector<1x32xf32>
    %71 = vector.broadcast %70 : vector<1x32xf32> to vector<2x32xf32>
    %72 = arith.addf %69, %71 : vector<2x32xf32>
    %cst_43 = arith.constant 0.000000e+00 : f32
    %73 = vector.broadcast %cst_43 : f32 to vector<2x32xf32>
    %74 = arith.maximumf %72, %73 : vector<2x32xf32>
    %c136 = arith.constant 136 : index
    %c0_44 = arith.constant 0 : index
    %75 = vector.load %arg2[%c136, %c0_44] : memref<176x128xf32, #tpu.memory_space<vmem>>, vector<32x3xf32>
    %cst_45 = arith.constant dense<0.000000e+00> : vector<2x3xf32>
    %76 = tpu.matmul %74, %75, %cst_45 {dimension_numbers = #tpu.dot_dimension_numbers<[1], [0], [0], [1], [0, 0, 1, 1], [], []>} : vector<2x32xf32>, vector<32x3xf32>, vector<2x3xf32> -> vector<2x3xf32>
    %c168 = arith.constant 168 : index
    %c0_46 = arith.constant 0 : index
    %77 = vector.load %arg2[%c168, %c0_46] : memref<176x128xf32, #tpu.memory_space<vmem>>, vector<1x3xf32>
    %78 = vector.broadcast %77 : vector<1x3xf32> to vector<2x3xf32>
    %79 = arith.addf %76, %78 : vector<2x3xf32>
    %80 = arith.negf %79 : vector<2x3xf32>
    %81 = math.exp %80 : vector<2x3xf32>
    %cst_47 = arith.constant 1.000000e+00 : f32
    %82 = vector.broadcast %cst_47 : f32 to vector<2x3xf32>
    %83 = arith.addf %82, %81 : vector<2x3xf32>
    %84 = arith.divf %82, %83 : vector<2x3xf32>
    %c0_48 = arith.constant 0 : index
    %c0_49 = arith.constant 0 : index
    %85 = vector.load %arg4[%c0_48, %c0_49] : memref<2x3xf32, #tpu.memory_space<vmem>>, vector<2x3xf32>
    tpu.vector_store %arg4[%c0_48, %c0_49], %84 {strides = array<i32>} : memref<2x3xf32, #tpu.memory_space<vmem>>, vector<2x3xf32>,
    return
  }
}

</mosaic_0001>

<llo_original>
// kernel: incentive_conv_forward.1
$region0: #{incentive_conv_forward.1}
  #allocation0 [shape = 'u32[]', space=smem, size = 0x4, offset = 0x4, fixed_abs, tag = 'smem constant byte address 0x4 - core index']
  #allocation1 [shape = 'u32[144,128]{1,0:T(1,128)}', space=vmem, size = 0x12000, scoped, tag = 'internal scratch']
  %s0 = inlined_call_operand.vmem [shape: f32[6,256], index: 0, kind: input, shape index: {}]
  %s1 = inlined_call_operand.vmem [shape: f32[2,2], index: 1, kind: input, shape index: {}]
  %s2 = inlined_call_operand.hbm [shape: f32[176,128], index: 2, kind: input, shape index: {}]
  %s3 = inlined_call_operand.hbm [shape: f32[4,32,256], index: 3, kind: input, shape index: {}]
  %s4 = inlined_call_operand.hbm [shape: f32[2,3], index: 4, kind: output, shape index: {}]
  %s5 = sld [smem:[#allocation0]]
  $region34: #{incentive_conv_forward.1} parent=0
    _
  %s7 = ssub.s32 1, %s5
  %s8 = scalar_select 0, %s7, %s5
  $region1: #{incentive_conv_forward.1} parent=0
    #allocation2 [shape = 'u8[90112]{0}', space=vmem, size = 0x16000, scoped, tag = 'input window, operand 2, single buffered']
    #allocation3 [shape = 's32[1]{0}', space=sflag, size = 0x4, scoped, tag = 'scoped memory for incentive_conv_forward.1']
    #allocation4 [shape = 's32[1]{0}', space=sflag, size = 0x4, scoped, tag = 'scoped memory for incentive_conv_forward.1']
    #allocation5 [shape = 'u8[131072]{0}', space=vmem, size = 0x20000, scoped, tag = 'input window, operand 3, single buffered']
    #allocation6 [shape = 's32[1]{0}', space=sflag, size = 0x4, scoped, tag = 'scoped memory for incentive_conv_forward.1']
    #allocation7 [shape = 'u8[1024]{0}', space=vmem, size = 0x400, scoped, tag = 'output window, operand 0, single buffered']
    %9 = vsyncpa [#allocation3], 0
    %10 = vsyncpa [#allocation6], 0
    %11 = vsyncpa [#allocation4], 0
    // Predicated region
    $region2: #{incentive_conv_forward.1} parent=1 // pred_check
      _
    $region3: #{incentive_conv_forward.1} parent=1 // pred_check_branch
      %13 = sbr.rel (0) target = $region5
    $region4: #{incentive_conv_forward.1} parent=1 // pred_region
      _
    $region5: #{incentive_conv_forward.1} parent=1 // pred_fallthru
      _
    // Predicated region
    $region6: #{incentive_conv_forward.1} parent=1 // pred_check
      _
    $region7: #{incentive_conv_forward.1} parent=1 // pred_check_branch
      %15 = sbr.rel (0) target = $region9
    $region8: #{incentive_conv_forward.1} parent=1 // pred_region
      _
    $region9: #{incentive_conv_forward.1} parent=1 // pred_fallthru
      _
    // Predicated region
    $region10: #{incentive_conv_forward.1} parent=1 // pred_check
      _
    $region11: #{incentive_conv_forward.1} parent=1 // pred_check_branch
      %17 = sbr.rel (0) target = $region13
    $region12: #{incentive_conv_forward.1} parent=1 // pred_region
      %s19 = ssub.s32 2816, 2816
      %20 = vsyncadd [#allocation3], %s19
      %s21 = sshll.u32 [#allocation2], 4
      %s22 = int_to_ptr.vmem [resolvable:$true] %s21
      %27 = dma.hbm_to_vmem [thread:$0]  %s2, 2816, %s22, [#allocation3], 128, 128, 8
    $region13: #{incentive_conv_forward.1} parent=1 // pred_fallthru
      _
    // Predicated region
    $region14: #{incentive_conv_forward.1} parent=1 // pred_check
      _
    $region15: #{incentive_conv_forward.1} parent=1 // pred_check_branch
      %29 = sbr.rel (0) target = $region17
    $region16: #{incentive_conv_forward.1} parent=1 // pred_region
      %s31 = ssub.s32 4096, 4096
      %32 = vsyncadd [#allocation6], %s31
      %s33 = sshll.u32 [#allocation5], 4
      %s34 = int_to_ptr.vmem [resolvable:$true] %s33
      %39 = dma.hbm_to_vmem [thread:$0]  %s3, 4096, %s34, [#allocation6], 256, 256, 16
    $region17: #{incentive_conv_forward.1} parent=1 // pred_fallthru
      _
    // Predicated region
    $region18: #{incentive_conv_forward.1} parent=1 // pred_check
      _
    $region19: #{incentive_conv_forward.1} parent=1 // pred_check_branch
      %41 = sbr.rel (0) target = $region21
    $region20: #{incentive_conv_forward.1} parent=1 // pred_region
      %42 = dma.done [#allocation3], 2816
    $region21: #{incentive_conv_forward.1} parent=1 // pred_fallthru
      _
    // Predicated region
    $region22: #{incentive_conv_forward.1} parent=1 // pred_check
      _
    $region23: #{incentive_conv_forward.1} parent=1 // pred_check_branch
      %44 = sbr.rel (0) target = $region25
    $region24: #{incentive_conv_forward.1} parent=1 // pred_region
      %45 = dma.done [#allocation6], 4096
    $region25: #{incentive_conv_forward.1} parent=1 // pred_fallthru
      _
    %v46 = vld [vmem:[%s0] sm:$0x3f]
    %v47 = vld [vmem:[%s0 + $0x8] sm:$0x3f]
    %v48 = vld [vmem:[#allocation2] sm:$0xff]
    %49 = vrot.lane.b32.xlu0 %v46, 127
    %v50 = vpop.permute.xlu0 %49
    %51 = vrot.lane.b32.xlu0 %v47, 127
    %v52 = vpop.permute.xlu0 %51
    %v53 = vlaneseq
    %v54 = vand.u32 %v53, 127
    %vm55 = vcmp.lt.s32.totalorder %v54, 127
    %v56 = vsel %vm55, %v50, %v52
    %v57 = vsel %vm55, %v52, %v50
    %v58 = vld [vmem:[#allocation2 + $0x8] sm:$0xff]
    %vm59 = vcmask 48128
    %v61 = vsel %vm59, %v58, 0
    %vm63 = vcmask 1045504
    %v65 = vsel %vm63, %v56, 0
    %v68 = vsel %vm63, %v57, 0
    %70 = vmatprep.subr.mxu0 %v68
    %71 = vmatpush1.msra.mxu0 %v65
    %72 = vmatprep.subr.mxu0 0.0
    %73 = vmatpush1.msra.mxu0 0.0
    %74 = vmatprep.subr.mxu0 0.0
    %75 = vmatpush1.msra.mxu0 0.0
    %76 = vmatprep.subr.mxu0 0.0
    %77 = vmatpush1.msra.mxu0 0.0
    %78 = vmatprep.subr.mxu0 0.0
    %79 = vmatpush1.msra.mxu0 0.0
    %80 = vmatprep.subr.mxu0 0.0
    %81 = vmatpush1.msra.mxu0 0.0
    %82 = vmatprep.subr.mxu0 0.0
    %83 = vmatpush1.msra.mxu0 0.0
    %84 = vmatprep.subr.mxu0 0.0
    %85 = vmatpush1.msra.mxu0 0.0
    %86 = vmatprep.subr.mxu0 0.0
    %87 = vmatpush1.msra.mxu0 0.0
    %88 = vmatprep.subr.mxu0 0.0
    %89 = vmatpush1.msra.mxu0 0.0
    %90 = vmatprep.subr.mxu0 0.0
    %91 = vmatpush1.msra.mxu0 0.0
    %92 = vmatprep.subr.mxu0 0.0
    %93 = vmatpush1.msra.mxu0 0.0
    %94 = vmatprep.subr.mxu0 0.0
    %95 = vmatpush1.msra.mxu0 0.0
    %96 = vmatprep.subr.mxu0 0.0
    %97 = vmatpush1.msra.mxu0 0.0
    %98 = vmatprep.subr.mxu0 0.0
    %99 = vmatpush1.msra.mxu0 0.0
    %100 = vmatprep.subr.mxu0 0.0
    %101 = vmatpush1.msra.mxu0 0.0
    %102 = vmatprep.subr.mxu0 0.0
    %103 = vmatpush1.msra.mxu0 0.0
    %104 = vmatprep.subr.mxu0 0.0
    %105 = vmatpush1.msra.mxu0 0.0
    %106 = vmatprep.subr.mxu0 0.0
    %107 = vmatpush1.msra.mxu0 0.0
    %108 = vmatprep.subr.mxu0 0.0
    %109 = vmatpush1.msra.mxu0 0.0
    %110 = vmatprep.subr.mxu0 0.0
    %111 = vmatpush1.msra.mxu0 0.0
    %112 = vmatprep.subr.mxu0 0.0
    %113 = vmatpush1.msra.mxu0 0.0
    %114 = vmatprep.subr.mxu0 0.0
    %115 = vmatpush1.msra.mxu0 0.0
    %116 = vmatprep.subr.mxu0 0.0
    %117 = vmatpush1.msra.mxu0 0.0
    %118 = vmatprep.subr.mxu0 0.0
    %119 = vmatpush1.msra.mxu0 0.0
    %120 = vmatprep.subr.mxu0 0.0
    %121 = vmatpush1.msra.mxu0 0.0
    %122 = vmatprep.subr.mxu0 0.0
    %123 = vmatpush1.msra.mxu0 0.0
    %124 = vmatprep.subr.mxu0 0.0
    %125 = vmatpush1.msra.mxu0 0.0
    %126 = vmatprep.subr.mxu0 0.0
    %127 = vmatpush1.msra.mxu0 0.0
    %128 = vmatprep.subr.mxu0 0.0
    %129 = vmatpush1.msra.mxu0 0.0
    %130 = vmatprep.subr.mxu0 0.0
    %131 = vmatpush1.msra.mxu0 0.0
    %132 = vmatprep.subr.mxu0 0.0
    %133 = vmatpush1.msra.mxu0 0.0
    %134 = vmatprep.mubr.f32.mxu0 0.0
    %135 = vmatmul.mubr.f32.gmra.mrb[0].mxu0 %v61
    %v136 = vpop.f32.mrb[0].mxu0
    %v137 = vadd.f32 0.0, %v136
    %v138 = vpop.f32.mrb[0].mxu0
    %v139 = vadd.f32 0.0, %v138
    %140 = vdwg.mxu0
    %141 = vrot.lane.b32.xlu0 %v46, 126
    %v142 = vpop.permute.xlu0 %141
    %143 = vrot.lane.b32.xlu0 %v47, 126
    %v144 = vpop.permute.xlu0 %143
    %vm145 = vcmp.lt.s32.totalorder %v54, 126
    %v146 = vsel %vm145, %v142, %v144
    %v147 = vsel %vm145, %v144, %v142
    %v148 = vld [vmem:[#allocation2 + $0x10] sm:$0xff]
    %149 = vrot.lane.b32.xlu0 %v46, 112
    %v150 = vpop.permute.xlu0 %149
    %151 = vrot.lane.b32.xlu0 %v47, 112
    %v152 = vpop.permute.xlu0 %151
    %vm153 = vcmp.lt.s32.totalorder %v54, 112
    %v154 = vsel %vm153, %v150, %v152
    %v155 = vsel %vm153, %v152, %v150
    %v156 = vld [vmem:[#allocation2 + $0x18] sm:$0xff]
    %v158 = vsel %vm59, %v156, 0
    %v161 = vsel %vm63, %v154, 0
    %v164 = vsel %vm63, %v155, 0
    %166 = vmatprep.subr.mxu0 %v164
    %167 = vmatpush1.msra.mxu0 %v161
    %168 = vmatprep.subr.mxu0 0.0
    %169 = vmatpush1.msra.mxu0 0.0
    %170 = vmatprep.subr.mxu0 0.0
    %171 = vmatpush1.msra.mxu0 0.0
    %172 = vmatprep.subr.mxu0 0.0
    %173 = vmatpush1.msra.mxu0 0.0
    %174 = vmatprep.subr.mxu0 0.0
    %175 = vmatpush1.msra.mxu0 0.0
    %176 = vmatprep.subr.mxu0 0.0
    %177 = vmatpush1.msra.mxu0 0.0
    %178 = vmatprep.subr.mxu0 0.0
    %179 = vmatpush1.msra.mxu0 0.0
    %180 = vmatprep.subr.mxu0 0.0
    %181 = vmatpush1.msra.mxu0 0.0
    %182 = vmatprep.subr.mxu0 0.0
    %183 = vmatpush1.msra.mxu0 0.0
    %184 = vmatprep.subr.mxu0 0.0
    %185 = vmatpush1.msra.mxu0 0.0
    %186 = vmatprep.subr.mxu0 0.0
    %187 = vmatpush1.msra.mxu0 0.0
    %188 = vmatprep.subr.mxu0 0.0
    %189 = vmatpush1.msra.mxu0 0.0
    %190 = vmatprep.subr.mxu0 0.0
    %191 = vmatpush1.msra.mxu0 0.0
    %192 = vmatprep.subr.mxu0 0.0
    %193 = vmatpush1.msra.mxu0 0.0
    %194 = vmatprep.subr.mxu0 0.0
    %195 = vmatpush1.msra.mxu0 0.0
    %196 = vmatprep.subr.mxu0 0.0
    %197 = vmatpush1.msra.mxu0 0.0
    %198 = vmatprep.subr.mxu0 0.0
    %199 = vmatpush1.msra.mxu0 0.0
    %200 = vmatprep.subr.mxu0 0.0
    %201 = vmatpush1.msra.mxu0 0.0
    %202 = vmatprep.subr.mxu0 0.0
    %203 = vmatpush1.msra.mxu0 0.0
    %204 = vmatprep.subr.mxu0 0.0
    %205 = vmatpush1.msra.mxu0 0.0
    %206 = vmatprep.subr.mxu0 0.0
    %207 = vmatpush1.msra.mxu0 0.0
    %208 = vmatprep.subr.mxu0 0.0
    %209 = vmatpush1.msra.mxu0 0.0
    %210 = vmatprep.subr.mxu0 0.0
    %211 = vmatpush1.msra.mxu0 0.0
    %212 = vmatprep.subr.mxu0 0.0
    %213 = vmatpush1.msra.mxu0 0.0
    %214 = vmatprep.subr.mxu0 0.0
    %215 = vmatpush1.msra.mxu0 0.0
    %216 = vmatprep.subr.mxu0 0.0
    %217 = vmatpush1.msra.mxu0 0.0
    %218 = vmatprep.subr.mxu0 0.0
    %219 = vmatpush1.msra.mxu0 0.0
    %220 = vmatprep.subr.mxu0 0.0
    %221 = vmatpush1.msra.mxu0 0.0
    %222 = vmatprep.subr.mxu0 0.0
    %223 = vmatpush1.msra.mxu0 0.0
    %224 = vmatprep.subr.mxu0 0.0
    %225 = vmatpush1.msra.mxu0 0.0
    %226 = vmatprep.subr.mxu0 0.0
    %227 = vmatpush1.msra.mxu0 0.0
    %228 = vmatprep.subr.mxu0 0.0
    %229 = vmatpush1.msra.mxu0 0.0
    %230 = vmatprep.mubr.f32.mxu0 0.0
    %231 = vmatmul.mubr.f32.gmra.mrb[0].mxu0 %v158
    %v232 = vpop.f32.mrb[0].mxu0
    %v233 = vadd.f32 0.0, %v232
    %v234 = vpop.f32.mrb[0].mxu0
    %v235 = vadd.f32 0.0, %v234
    %236 = vdwg.mxu0
    %237 = vrot.lane.b32.xlu0 %v46, 111
    %v238 = vpop.permute.xlu0 %237
    %239 = vrot.lane.b32.xlu0 %v47, 111
    %v240 = vpop.permute.xlu0 %239
    %vm241 = vcmp.lt.s32.totalorder %v54, 111
    %v242 = vsel %vm241, %v238, %v240
    %v243 = vsel %vm241, %v240, %v238
    %v244 = vld [vmem:[#allocation2 + $0x20] sm:$0xff]
    %245 = vrot.lane.b32.xlu0 %v46, 110
    %v246 = vpop.permute.xlu0 %245
    %247 = vrot.lane.b32.xlu0 %v47, 110
    %v248 = vpop.permute.xlu0 %247
    %vm249 = vcmp.lt.s32.totalorder %v54, 110
    %v250 = vsel %vm249, %v246, %v248
    %v251 = vsel %vm249, %v248, %v246
    %v252 = vld [vmem:[#allocation2 + $0x28] sm:$0xff]
    %v254 = vsel %vm59, %v252, 0
    %v257 = vsel %vm63, %v250, 0
    %v260 = vsel %vm63, %v251, 0
    %262 = vmatprep.subr.mxu0 %v260
    %263 = vmatpush1.msra.mxu0 %v257
    %264 = vmatprep.subr.mxu0 0.0
    %265 = vmatpush1.msra.mxu0 0.0
    %266 = vmatprep.subr.mxu0 0.0
    %267 = vmatpush1.msra.mxu0 0.0
    %268 = vmatprep.subr.mxu0 0.0
    %269 = vmatpush1.msra.mxu0 0.0
    %270 = vmatprep.subr.mxu0 0.0
    %271 = vmatpush1.msra.mxu0 0.0
    %272 = vmatprep.subr.mxu0 0.0
    %273 = vmatpush1.msra.mxu0 0.0
    %274 = vmatprep.subr.mxu0 0.0
    %275 = vmatpush1.msra.mxu0 0.0
    %276 = vmatprep.subr.mxu0 0.0
    %277 = vmatpush1.msra.mxu0 0.0
    %278 = vmatprep.subr.mxu0 0.0
    %279 = vmatpush1.msra.mxu0 0.0
    %280 = vmatprep.subr.mxu0 0.0
    %281 = vmatpush1.msra.mxu0 0.0
    %282 = vmatprep.subr.mxu0 0.0
    %283 = vmatpush1.msra.mxu0 0.0
    %284 = vmatprep.subr.mxu0 0.0
    %285 = vmatpush1.msra.mxu0 0.0
    %286 = vmatprep.subr.mxu0 0.0
    %287 = vmatpush1.msra.mxu0 0.0
    %288 = vmatprep.subr.mxu0 0.0
    %289 = vmatpush1.msra.mxu0 0.0
    %290 = vmatprep.subr.mxu0 0.0
    %291 = vmatpush1.msra.mxu0 0.0
    %292 = vmatprep.subr.mxu0 0.0
    %293 = vmatpush1.msra.mxu0 0.0
    %294 = vmatprep.subr.mxu0 0.0
    %295 = vmatpush1.msra.mxu0 0.0
    %296 = vmatprep.subr.mxu0 0.0
    %297 = vmatpush1.msra.mxu0 0.0
    %298 = vmatprep.subr.mxu0 0.0
    %299 = vmatpush1.msra.mxu0 0.0
    %300 = vmatprep.subr.mxu0 0.0
    %301 = vmatpush1.msra.mxu0 0.0
    %302 = vmatprep.subr.mxu0 0.0
    %303 = vmatpush1.msra.mxu0 0.0
    %304 = vmatprep.subr.mxu0 0.0
    %305 = vmatpush1.msra.mxu0 0.0
    %306 = vmatprep.subr.mxu0 0.0
    %307 = vmatpush1.msra.mxu0 0.0
    %308 = vmatprep.subr.mxu0 0.0
    %309 = vmatpush1.msra.mxu0 0.0
    %310 = vmatprep.subr.mxu0 0.0
    %311 = vmatpush1.msra.mxu0 0.0
    %312 = vmatprep.subr.mxu0 0.0
    %313 = vmatpush1.msra.mxu0 0.0
    %314 = vmatprep.subr.mxu0 0.0
    %315 = vmatpush1.msra.mxu0 0.0
    %316 = vmatprep.subr.mxu0 0.0
    %317 = vmatpush1.msra.mxu0 0.0
    %318 = vmatprep.subr.mxu0 0.0
    %319 = vmatpush1.msra.mxu0 0.0
    %320 = vmatprep.subr.mxu0 0.0
    %321 = vmatpush1.msra.mxu0 0.0
    %322 = vmatprep.subr.mxu0 0.0
    %323 = vmatpush1.msra.mxu0 0.0
    %324 = vmatprep.subr.mxu0 0.0
    %325 = vmatpush1.msra.mxu0 0.0
    %326 = vmatprep.mubr.f32.mxu0 0.0
    %327 = vmatmul.mubr.f32.gmra.mrb[0].mxu0 %v254
    %v328 = vpop.f32.mrb[0].mxu0
    %v329 = vadd.f32 0.0, %v328
    %v330 = vpop.f32.mrb[0].mxu0
    %v331 = vadd.f32 0.0, %v330
    %332 = vdwg.mxu0
    %333 = vrot.lane.b32.xlu0 %v46, 96
    %v334 = vpop.permute.xlu0 %333
    %335 = vrot.lane.b32.xlu0 %v47, 96
    %v336 = vpop.permute.xlu0 %335
    %vm337 = vcmp.lt.s32.totalorder %v54, 96
    %v338 = vsel %vm337, %v334, %v336
    %v339 = vsel %vm337, %v336, %v334
    %v340 = vld [vmem:[#allocation2 + $0x30] sm:$0xff]
    %341 = vrot.lane.b32.xlu0 %v46, 95
    %v342 = vpop.permute.xlu0 %341
    %343 = vrot.lane.b32.xlu0 %v47, 95
    %v344 = vpop.permute.xlu0 %343
    %vm345 = vcmp.lt.s32.totalorder %v54, 95
    %v346 = vsel %vm345, %v342, %v344
    %v347 = vsel %vm345, %v344, %v342
    %v348 = vld [vmem:[#allocation2 + $0x38] sm:$0xff]
    %v350 = vsel %vm59, %v348, 0
    %v353 = vsel %vm63, %v346, 0
    %v356 = vsel %vm63, %v347, 0
    %358 = vmatprep.subr.mxu0 %v356
    %359 = vmatpush1.msra.mxu0 %v353
    %360 = vmatprep.subr.mxu0 0.0
    %361 = vmatpush1.msra.mxu0 0.0
    %362 = vmatprep.subr.mxu0 0.0
    %363 = vmatpush1.msra.mxu0 0.0
    %364 = vmatprep.subr.mxu0 0.0
    %365 = vmatpush1.msra.mxu0 0.0
    %366 = vmatprep.subr.mxu0 0.0
    %367 = vmatpush1.msra.mxu0 0.0
    %368 = vmatprep.subr.mxu0 0.0
    %369 = vmatpush1.msra.mxu0 0.0
    %370 = vmatprep.subr.mxu0 0.0
    %371 = vmatpush1.msra.mxu0 0.0
    %372 = vmatprep.subr.mxu0 0.0
    %373 = vmatpush1.msra.mxu0 0.0
    %374 = vmatprep.subr.mxu0 0.0
    %375 = vmatpush1.msra.mxu0 0.0
    %376 = vmatprep.subr.mxu0 0.0
    %377 = vmatpush1.msra.mxu0 0.0
    %378 = vmatprep.subr.mxu0 0.0
    %379 = vmatpush1.msra.mxu0 0.0
    %380 = vmatprep.subr.mxu0 0.0
    %381 = vmatpush1.msra.mxu0 0.0
    %382 = vmatprep.subr.mxu0 0.0
    %383 = vmatpush1.msra.mxu0 0.0
    %384 = vmatprep.subr.mxu0 0.0
    %385 = vmatpush1.msra.mxu0 0.0
    %386 = vmatprep.subr.mxu0 0.0
    %387 = vmatpush1.msra.mxu0 0.0
    %388 = vmatprep.subr.mxu0 0.0
    %389 = vmatpush1.msra.mxu0 0.0
    %390 = vmatprep.subr.mxu0 0.0
    %391 = vmatpush1.msra.mxu0 0.0
    %392 = vmatprep.subr.mxu0 0.0
    %393 = vmatpush1.msra.mxu0 0.0
    %394 = vmatprep.subr.mxu0 0.0
    %395 = vmatpush1.msra.mxu0 0.0
    %396 = vmatprep.subr.mxu0 0.0
    %397 = vmatpush1.msra.mxu0 0.0
    %398 = vmatprep.subr.mxu0 0.0
    %399 = vmatpush1.msra.mxu0 0.0
    %400 = vmatprep.subr.mxu0 0.0
    %401 = vmatpush1.msra.mxu0 0.0
    %402 = vmatprep.subr.mxu0 0.0
    %403 = vmatpush1.msra.mxu0 0.0
    %404 = vmatprep.subr.mxu0 0.0
    %405 = vmatpush1.msra.mxu0 0.0
    %406 = vmatprep.subr.mxu0 0.0
    %407 = vmatpush1.msra.mxu0 0.0
    %408 = vmatprep.subr.mxu0 0.0
    %409 = vmatpush1.msra.mxu0 0.0
    %410 = vmatprep.subr.mxu0 0.0
    %411 = vmatpush1.msra.mxu0 0.0
    %412 = vmatprep.subr.mxu0 0.0
    %413 = vmatpush1.msra.mxu0 0.0
    %414 = vmatprep.subr.mxu0 0.0
    %415 = vmatpush1.msra.mxu0 0.0
    %416 = vmatprep.subr.mxu0 0.0
    %417 = vmatpush1.msra.mxu0 0.0
    %418 = vmatprep.subr.mxu0 0.0
    %419 = vmatpush1.msra.mxu0 0.0
    %420 = vmatprep.subr.mxu0 0.0
    %421 = vmatpush1.msra.mxu0 0.0
    %422 = vmatprep.mubr.f32.mxu0 0.0
    %423 = vmatmul.mubr.f32.gmra.mrb[0].mxu0 %v350
    %v424 = vpop.f32.mrb[0].mxu0
    %v425 = vadd.f32 0.0, %v424
    %v426 = vpop.f32.mrb[0].mxu0
    %v427 = vadd.f32 0.0, %v426
    %428 = vdwg.mxu0
    %429 = vrot.lane.b32.xlu0 %v46, 94
    %v430 = vpop.permute.xlu0 %429
    %431 = vrot.lane.b32.xlu0 %v47, 94
    %v432 = vpop.permute.xlu0 %431
    %vm433 = vcmp.lt.s32.totalorder %v54, 94
    %v434 = vsel %vm433, %v430, %v432
    %v435 = vsel %vm433, %v432, %v430
    %v436 = vld [vmem:[#allocation2 + $0x40] sm:$0xff]
    %v438 = vsel %vm59, %v436, 0
    %v441 = vsel %vm63, %v434, 0
    %v444 = vsel %vm63, %v435, 0
    %446 = vmatprep.subr.mxu0 %v444
    %447 = vmatpush1.msra.mxu0 %v441
    %448 = vmatprep.subr.mxu0 0.0
    %449 = vmatpush1.msra.mxu0 0.0
    %450 = vmatprep.subr.mxu0 0.0
    %451 = vmatpush1.msra.mxu0 0.0
    %452 = vmatprep.subr.mxu0 0.0
    %453 = vmatpush1.msra.mxu0 0.0
    %454 = vmatprep.subr.mxu0 0.0
    %455 = vmatpush1.msra.mxu0 0.0
    %456 = vmatprep.subr.mxu0 0.0
    %457 = vmatpush1.msra.mxu0 0.0
    %458 = vmatprep.subr.mxu0 0.0
    %459 = vmatpush1.msra.mxu0 0.0
    %460 = vmatprep.subr.mxu0 0.0
    %461 = vmatpush1.msra.mxu0 0.0
    %462 = vmatprep.subr.mxu0 0.0
    %463 = vmatpush1.msra.mxu0 0.0
    %464 = vmatprep.subr.mxu0 0.0
    %465 = vmatpush1.msra.mxu0 0.0
    %466 = vmatprep.subr.mxu0 0.0
    %467 = vmatpush1.msra.mxu0 0.0
    %468 = vmatprep.subr.mxu0 0.0
    %469 = vmatpush1.msra.mxu0 0.0
    %470 = vmatprep.subr.mxu0 0.0
    %471 = vmatpush1.msra.mxu0 0.0
    %472 = vmatprep.subr.mxu0 0.0
    %473 = vmatpush1.msra.mxu0 0.0
    %474 = vmatprep.subr.mxu0 0.0
    %475 = vmatpush1.msra.mxu0 0.0
    %476 = vmatprep.subr.mxu0 0.0
    %477 = vmatpush1.msra.mxu0 0.0
    %478 = vmatprep.subr.mxu0 0.0
    %479 = vmatpush1.msra.mxu0 0.0
    %480 = vmatprep.subr.mxu0 0.0
    %481 = vmatpush1.msra.mxu0 0.0
    %482 = vmatprep.subr.mxu0 0.0
    %483 = vmatpush1.msra.mxu0 0.0
    %484 = vmatprep.subr.mxu0 0.0
    %485 = vmatpush1.msra.mxu0 0.0
    %486 = vmatprep.subr.mxu0 0.0
    %487 = vmatpush1.msra.mxu0 0.0
    %488 = vmatprep.subr.mxu0 0.0
    %489 = vmatpush1.msra.mxu0 0.0
    %490 = vmatprep.subr.mxu0 0.0
    %491 = vmatpush1.msra.mxu0 0.0
    %492 = vmatprep.subr.mxu0 0.0
    %493 = vmatpush1.msra.mxu0 0.0
    %494 = vmatprep.subr.mxu0 0.0
    %495 = vmatpush1.msra.mxu0 0.0
    %496 = vmatprep.subr.mxu0 0.0
    %497 = vmatpush1.msra.mxu0 0.0
    %498 = vmatprep.subr.mxu0 0.0
    %499 = vmatpush1.msra.mxu0 0.0
    %500 = vmatprep.subr.mxu0 0.0
    %501 = vmatpush1.msra.mxu0 0.0
    %502 = vmatprep.subr.mxu0 0.0
    %503 = vmatpush1.msra.mxu0 0.0
    %504 = vmatprep.subr.mxu0 0.0
    %505 = vmatpush1.msra.mxu0 0.0
    %506 = vmatprep.subr.mxu0 0.0
    %507 = vmatpush1.msra.mxu0 0.0
    %508 = vmatprep.subr.mxu0 0.0
    %509 = vmatpush1.msra.mxu0 0.0
    %510 = vmatprep.mubr.f32.mxu0 0.0
    %511 = vmatmul.mubr.f32.gmra.mrb[0].mxu0 %v438
    %v512 = vpop.f32.mrb[0].mxu0
    %v513 = vadd.f32 0.0, %v512
    %v514 = vpop.f32.mrb[0].mxu0
    %v515 = vadd.f32 0.0, %v514
    %516 = vdwg.mxu0
    %v518 = vsel %vm59, %v48, 0
    %v521 = vsel %vm63, %v46, 0
    %v524 = vsel %vm63, %v47, 0
    %526 = vmatprep.subr.mxu0 %v524
    %527 = vmatpush1.msra.mxu0 %v521
    %528 = vmatprep.subr.mxu0 0.0
    %529 = vmatpush1.msra.mxu0 0.0
    %530 = vmatprep.subr.mxu0 0.0
    %531 = vmatpush1.msra.mxu0 0.0
    %532 = vmatprep.subr.mxu0 0.0
    %533 = vmatpush1.msra.mxu0 0.0
    %534 = vmatprep.subr.mxu0 0.0
    %535 = vmatpush1.msra.mxu0 0.0
    %536 = vmatprep.subr.mxu0 0.0
    %537 = vmatpush1.msra.mxu0 0.0
    %538 = vmatprep.subr.mxu0 0.0
    %539 = vmatpush1.msra.mxu0 0.0
    %540 = vmatprep.subr.mxu0 0.0
    %541 = vmatpush1.msra.mxu0 0.0
    %542 = vmatprep.subr.mxu0 0.0
    %543 = vmatpush1.msra.mxu0 0.0
    %544 = vmatprep.subr.mxu0 0.0
    %545 = vmatpush1.msra.mxu0 0.0
    %546 = vmatprep.subr.mxu0 0.0
    %547 = vmatpush1.msra.mxu0 0.0
    %548 = vmatprep.subr.mxu0 0.0
    %549 = vmatpush1.msra.mxu0 0.0
    %550 = vmatprep.subr.mxu0 0.0
    %551 = vmatpush1.msra.mxu0 0.0
    %552 = vmatprep.subr.mxu0 0.0
    %553 = vmatpush1.msra.mxu0 0.0
    %554 = vmatprep.subr.mxu0 0.0
    %555 = vmatpush1.msra.mxu0 0.0
    %556 = vmatprep.subr.mxu0 0.0
    %557 = vmatpush1.msra.mxu0 0.0
    %558 = vmatprep.subr.mxu0 0.0
    %559 = vmatpush1.msra.mxu0 0.0
    %560 = vmatprep.subr.mxu0 0.0
    %561 = vmatpush1.msra.mxu0 0.0
    %562 = vmatprep.subr.mxu0 0.0
    %563 = vmatpush1.msra.mxu0 0.0
    %564 = vmatprep.subr.mxu0 0.0
    %565 = vmatpush1.msra.mxu0 0.0
    %566 = vmatprep.subr.mxu0 0.0
    %567 = vmatpush1.msra.mxu0 0.0
    %568 = vmatprep.subr.mxu0 0.0
    %569 = vmatpush1.msra.mxu0 0.0
    %570 = vmatprep.subr.mxu0 0.0
    %571 = vmatpush1.msra.mxu0 0.0
    %572 = vmatprep.subr.mxu0 0.0
    %573 = vmatpush1.msra.mxu0 0.0
    %574 = vmatprep.subr.mxu0 0.0
    %575 = vmatpush1.msra.mxu0 0.0
    %576 = vmatprep.subr.mxu0 0.0
    %577 = vmatpush1.msra.mxu0 0.0
    %578 = vmatprep.subr.mxu0 0.0
    %579 = vmatpush1.msra.mxu0 0.0
    %580 = vmatprep.subr.mxu0 0.0
    %581 = vmatpush1.msra.mxu0 0.0
    %582 = vmatprep.subr.mxu0 0.0
    %583 = vmatpush1.msra.mxu0 0.0
    %584 = vmatprep.subr.mxu0 0.0
    %585 = vmatpush1.msra.mxu0 0.0
    %586 = vmatprep.subr.mxu0 0.0
    %587 = vmatpush1.msra.mxu0 0.0
    %588 = vmatprep.subr.mxu0 0.0
    %589 = vmatpush1.msra.mxu0 0.0
    %590 = vmatprep.mubr.f32.mxu0 0.0
    %591 = vmatmul.mubr.f32.gmra.mrb[0].mxu0 %v518
    %v592 = vpop.f32.mrb[0].mxu0
    %v593 = vadd.f32 %v137, %v592
    %v594 = vpop.f32.mrb[0].mxu0
    %v595 = vadd.f32 %v139, %v594
    %596 = vdwg.mxu0
    %v598 = vsel %vm59, %v148, 0
    %v601 = vsel %vm63, %v146, 0
    %v604 = vsel %vm63, %v147, 0
    %606 = vmatprep.subr.mxu0 %v604
    %607 = vmatpush1.msra.mxu0 %v601
    %608 = vmatprep.subr.mxu0 0.0
    %609 = vmatpush1.msra.mxu0 0.0
    %610 = vmatprep.subr.mxu0 0.0
    %611 = vmatpush1.msra.mxu0 0.0
    %612 = vmatprep.subr.mxu0 0.0
    %613 = vmatpush1.msra.mxu0 0.0
    %614 = vmatprep.subr.mxu0 0.0
    %615 = vmatpush1.msra.mxu0 0.0
    %616 = vmatprep.subr.mxu0 0.0
    %617 = vmatpush1.msra.mxu0 0.0
    %618 = vmatprep.subr.mxu0 0.0
    %619 = vmatpush1.msra.mxu0 0.0
    %620 = vmatprep.subr.mxu0 0.0
    %621 = vmatpush1.msra.mxu0 0.0
    %622 = vmatprep.subr.mxu0 0.0
    %623 = vmatpush1.msra.mxu0 0.0
    %624 = vmatprep.subr.mxu0 0.0
    %625 = vmatpush1.msra.mxu0 0.0
    %626 = vmatprep.subr.mxu0 0.0
    %627 = vmatpush1.msra.mxu0 0.0
    %628 = vmatprep.subr.mxu0 0.0
    %629 = vmatpush1.msra.mxu0 0.0
    %630 = vmatprep.subr.mxu0 0.0
    %631 = vmatpush1.msra.mxu0 0.0
    %632 = vmatprep.subr.mxu0 0.0
    %633 = vmatpush1.msra.mxu0 0.0
    %634 = vmatprep.subr.mxu0 0.0
    %635 = vmatpush1.msra.mxu0 0.0
    %636 = vmatprep.subr.mxu0 0.0
    %637 = vmatpush1.msra.mxu0 0.0
    %638 = vmatprep.subr.mxu0 0.0
    %639 = vmatpush1.msra.mxu0 0.0
    %640 = vmatprep.subr.mxu0 0.0
    %641 = vmatpush1.msra.mxu0 0.0
    %642 = vmatprep.subr.mxu0 0.0
    %643 = vmatpush1.msra.mxu0 0.0
    %644 = vmatprep.subr.mxu0 0.0
    %645 = vmatpush1.msra.mxu0 0.0
    %646 = vmatprep.subr.mxu0 0.0
    %647 = vmatpush1.msra.mxu0 0.0
    %648 = vmatprep.subr.mxu0 0.0
    %649 = vmatpush1.msra.mxu0 0.0
    %650 = vmatprep.subr.mxu0 0.0
    %651 = vmatpush1.msra.mxu0 0.0
    %652 = vmatprep.subr.mxu0 0.0
    %653 = vmatpush1.msra.mxu0 0.0
    %654 = vmatprep.subr.mxu0 0.0
    %655 = vmatpush1.msra.mxu0 0.0
    %656 = vmatprep.subr.mxu0 0.0
    %657 = vmatpush1.msra.mxu0 0.0
    %658 = vmatprep.subr.mxu0 0.0
    %659 = vmatpush1.msra.mxu0 0.0
    %660 = vmatprep.subr.mxu0 0.0
    %661 = vmatpush1.msra.mxu0 0.0
    %662 = vmatprep.subr.mxu0 0.0
    %663 = vmatpush1.msra.mxu0 0.0
    %664 = vmatprep.subr.mxu0 0.0
    %665 = vmatpush1.msra.mxu0 0.0
    %666 = vmatprep.subr.mxu0 0.0
    %667 = vmatpush1.msra.mxu0 0.0
    %668 = vmatprep.subr.mxu0 0.0
    %669 = vmatpush1.msra.mxu0 0.0
    %670 = vmatprep.mubr.f32.mxu0 0.0
    %671 = vmatmul.mubr.f32.gmra.mrb[0].mxu0 %v598
    %v672 = vpop.f32.mrb[0].mxu0
    %v673 = vadd.f32 %v233, %v672
    %v674 = vpop.f32.mrb[0].mxu0
    %v675 = vadd.f32 %v235, %v674
    %676 = vdwg.mxu0
    %v678 = vsel %vm59, %v244, 0
    %v681 = vsel %vm63, %v242, 0
    %v684 = vsel %vm63, %v243, 0
    %686 = vmatprep.subr.mxu0 %v684
    %687 = vmatpush1.msra.mxu0 %v681
    %688 = vmatprep.subr.mxu0 0.0
    %689 = vmatpush1.msra.mxu0 0.0
    %690 = vmatprep.subr.mxu0 0.0
    %691 = vmatpush1.msra.mxu0 0.0
    %692 = vmatprep.subr.mxu0 0.0
    %693 = vmatpush1.msra.mxu0 0.0
    %694 = vmatprep.subr.mxu0 0.0
    %695 = vmatpush1.msra.mxu0 0.0
    %696 = vmatprep.subr.mxu0 0.0
    %697 = vmatpush1.msra.mxu0 0.0
    %698 = vmatprep.subr.mxu0 0.0
    %699 = vmatpush1.msra.mxu0 0.0
    %700 = vmatprep.subr.mxu0 0.0
    %701 = vmatpush1.msra.mxu0 0.0
    %702 = vmatprep.subr.mxu0 0.0
    %703 = vmatpush1.msra.mxu0 0.0
    %704 = vmatprep.subr.mxu0 0.0
    %705 = vmatpush1.msra.mxu0 0.0
    %706 = vmatprep.subr.mxu0 0.0
    %707 = vmatpush1.msra.mxu0 0.0
    %708 = vmatprep.subr.mxu0 0.0
    %709 = vmatpush1.msra.mxu0 0.0
    %710 = vmatprep.subr.mxu0 0.0
    %711 = vmatpush1.msra.mxu0 0.0
    %712 = vmatprep.subr.mxu0 0.0
    %713 = vmatpush1.msra.mxu0 0.0
    %714 = vmatprep.subr.mxu0 0.0
    %715 = vmatpush1.msra.mxu0 0.0
    %716 = vmatprep.subr.mxu0 0.0
    %717 = vmatpush1.msra.mxu0 0.0
    %718 = vmatprep.subr.mxu0 0.0
    %719 = vmatpush1.msra.mxu0 0.0
    %720 = vmatprep.subr.mxu0 0.0
    %721 = vmatpush1.msra.mxu0 0.0
    %722 = vmatprep.subr.mxu0 0.0
    %723 = vmatpush1.msra.mxu0 0.0
    %724 = vmatprep.subr.mxu0 0.0
    %725 = vmatpush1.msra.mxu0 0.0
    %726 = vmatprep.subr.mxu0 0.0
    %727 = vmatpush1.msra.mxu0 0.0
    %728 = vmatprep.subr.mxu0 0.0
    %729 = vmatpush1.msra.mxu0 0.0
    %730 = vmatprep.subr.mxu0 0.0
    %731 = vmatpush1.msra.mxu0 0.0
    %732 = vmatprep.subr.mxu0 0.0
    %733 = vmatpush1.msra.mxu0 0.0
    %734 = vmatprep.subr.mxu0 0.0
    %735 = vmatpush1.msra.mxu0 0.0
    %736 = vmatprep.subr.mxu0 0.0
    %737 = vmatpush1.msra.mxu0 0.0
    %738 = vmatprep.subr.mxu0 0.0
    %739 = vmatpush1.msra.mxu0 0.0
    %740 = vmatprep.subr.mxu0 0.0
    %741 = vmatpush1.msra.mxu0 0.0
    %742 = vmatprep.subr.mxu0 0.0
    %743 = vmatpush1.msra.mxu0 0.0
    %744 = vmatprep.subr.mxu0 0.0
    %745 = vmatpush1.msra.mxu0 0.0
    %746 = vmatprep.subr.mxu0 0.0
    %747 = vmatpush1.msra.mxu0 0.0
    %748 = vmatprep.subr.mxu0 0.0
    %749 = vmatpush1.msra.mxu0 0.0
    %750 = vmatprep.mubr.f32.mxu0 0.0
    %751 = vmatmul.mubr.f32.gmra.mrb[0].mxu0 %v678
    %v752 = vpop.f32.mrb[0].mxu0
    %v753 = vadd.f32 %v329, %v752
    %v754 = vpop.f32.mrb[0].mxu0
    %v755 = vadd.f32 %v331, %v754
    %756 = vdwg.mxu0
    %v758 = vsel %vm59, %v340, 0
    %v761 = vsel %vm63, %v338, 0
    %v764 = vsel %vm63, %v339, 0
    %766 = vmatprep.subr.mxu0 %v764
    %767 = vmatpush1.msra.mxu0 %v761
    %768 = vmatprep.subr.mxu0 0.0
    %769 = vmatpush1.msra.mxu0 0.0
    %770 = vmatprep.subr.mxu0 0.0
    %771 = vmatpush1.msra.mxu0 0.0
    %772 = vmatprep.subr.mxu0 0.0
    %773 = vmatpush1.msra.mxu0 0.0
    %774 = vmatprep.subr.mxu0 0.0
    %775 = vmatpush1.msra.mxu0 0.0
    %776 = vmatprep.subr.mxu0 0.0
    %777 = vmatpush1.msra.mxu0 0.0
    %778 = vmatprep.subr.mxu0 0.0
    %779 = vmatpush1.msra.mxu0 0.0
    %780 = vmatprep.subr.mxu0 0.0
    %781 = vmatpush1.msra.mxu0 0.0
    %782 = vmatprep.subr.mxu0 0.0
    %783 = vmatpush1.msra.mxu0 0.0
    %784 = vmatprep.subr.mxu0 0.0
    %785 = vmatpush1.msra.mxu0 0.0
    %786 = vmatprep.subr.mxu0 0.0
    %787 = vmatpush1.msra.mxu0 0.0
    %788 = vmatprep.subr.mxu0 0.0
    %789 = vmatpush1.msra.mxu0 0.0
    %790 = vmatprep.subr.mxu0 0.0
    %791 = vmatpush1.msra.mxu0 0.0
    %792 = vmatprep.subr.mxu0 0.0
    %793 = vmatpush1.msra.mxu0 0.0
    %794 = vmatprep.subr.mxu0 0.0
    %795 = vmatpush1.msra.mxu0 0.0
    %796 = vmatprep.subr.mxu0 0.0
    %797 = vmatpush1.msra.mxu0 0.0
    %798 = vmatprep.subr.mxu0 0.0
    %799 = vmatpush1.msra.mxu0 0.0
    %800 = vmatprep.subr.mxu0 0.0
    %801 = vmatpush1.msra.mxu0 0.0
    %802 = vmatprep.subr.mxu0 0.0
    %803 = vmatpush1.msra.mxu0 0.0
    %804 = vmatprep.subr.mxu0 0.0
    %805 = vmatpush1.msra.mxu0 0.0
    %806 = vmatprep.subr.mxu0 0.0
    %807 = vmatpush1.msra.mxu0 0.0
    %808 = vmatprep.subr.mxu0 0.0
    %809 = vmatpush1.msra.mxu0 0.0
    %810 = vmatprep.subr.mxu0 0.0
    %811 = vmatpush1.msra.mxu0 0.0
    %812 = vmatprep.subr.mxu0 0.0
    %813 = vmatpush1.msra.mxu0 0.0
    %814 = vmatprep.subr.mxu0 0.0
    %815 = vmatpush1.msra.mxu0 0.0
    %816 = vmatprep.subr.mxu0 0.0
    %817 = vmatpush1.msra.mxu0 0.0
    %818 = vmatprep.subr.mxu0 0.0
    %819 = vmatpush1.msra.mxu0 0.0
    %820 = vmatprep.subr.mxu0 0.0
    %821 = vmatpush1.msra.mxu0 0.0
    %822 = vmatprep.subr.mxu0 0.0
    %823 = vmatpush1.msra.mxu0 0.0
    %824 = vmatprep.subr.mxu0 0.0
    %825 = vmatpush1.msra.mxu0 0.0
    %826 = vmatprep.subr.mxu0 0.0
    %827 = vmatpush1.msra.mxu0 0.0
    %828 = vmatprep.subr.mxu0 0.0
    %829 = vmatpush1.msra.mxu0 0.0
    %830 = vmatprep.mubr.f32.mxu0 0.0
    %831 = vmatmul.mubr.f32.gmra.mrb[0].mxu0 %v758
    %v832 = vpop.f32.mrb[0].mxu0
    %v833 = vadd.f32 %v425, %v832
    %v834 = vpop.f32.mrb[0].mxu0
    %v835 = vadd.f32 %v427, %v834
    %836 = vdwg.mxu0
    %v837 = vadd.f32 %v593, %v673
    %v838 = vadd.f32 %v595, %v675
    %v839 = vadd.f32 %v753, %v833
    %v840 = vadd.f32 %v755, %v835
    %v841 = vadd.f32 %v837, %v839
    %v842 = vadd.f32 %v838, %v840
    %v843 = vadd.f32 %v841, %v513
    %v844 = vadd.f32 %v842, %v515
    %v845 = vld [vmem:[#allocation2 + $0x48] sm:$0xff]
    %847 = vset.pattern.permute.xlu0 0
    %848 = vperm.xlu0 %847, %v845
    %v849 = vpop.permute.xlu0 %848
    %v851 = vadd.f32 %v843, %v849
    %v852 = vadd.f32 %v844, %v849
    %v853 = vmax.f32 %v851, 0.0
    %v854 = vmax.f32 %v852, 0.0
    %v855 = vld [vmem:[#allocation5] sm:$0xff]
    %v856 = vld [vmem:[#allocation5 + $0x8] sm:$0xff]
    %v857 = vld [vmem:[#allocation5 + $0x10] sm:$0xff]
    %v858 = vld [vmem:[#allocation5 + $0x18] sm:$0xff]
    %v859 = vld [vmem:[#allocation5 + $0x20] sm:$0xff]
    %v860 = vld [vmem:[#allocation5 + $0x28] sm:$0xff]
    %v861 = vld [vmem:[#allocation5 + $0x30] sm:$0xff]
    %v862 = vld [vmem:[#allocation5 + $0x38] sm:$0xff]
    %s863 = scalar_lea.vmem [#allocation5], 64
    %v864 = vld [vmem:[%s863] sm:$0xff]
    %v865 = vld [vmem:[%s863 + $0x8] sm:$0xff]
    %v866 = vld [vmem:[%s863 + $0x10] sm:$0xff]
    %v867 = vld [vmem:[%s863 + $0x18] sm:$0xff]
    %v868 = vld [vmem:[%s863 + $0x20] sm:$0xff]
    %v869 = vld [vmem:[%s863 + $0x28] sm:$0xff]
    %v870 = vld [vmem:[%s863 + $0x30] sm:$0xff]
    %v871 = vld [vmem:[%s863 + $0x38] sm:$0xff]
    %v874 = vrot.slane %v853, 2
    %v875 = vrot.slane %v854, 2
    %878 = vmatprep.subr.mxu0 %v865
    %879 = vmatpush1.xpose.msra.mxu0 %v864
    %880 = vmatprep.subr.mxu0 %v867
    %881 = vmatpush1.xpose.msra.mxu0 %v866
    %882 = vmatprep.subr.mxu0 %v869
    %883 = vmatpush1.xpose.msra.mxu0 %v868
    %884 = vmatprep.subr.mxu0 %v871
    %885 = vmatpush1.xpose.msra.mxu0 %v870
    %886 = vmatprep.subr.mxu0 0.0
    %887 = vmatpush1.xpose.msra.mxu0 0.0
    %888 = vmatprep.subr.mxu0 0.0
    %889 = vmatpush1.xpose.msra.mxu0 0.0
    %890 = vmatprep.subr.mxu0 0.0
    %891 = vmatpush1.xpose.msra.mxu0 0.0
    %892 = vmatprep.subr.mxu0 0.0
    %893 = vmatpush1.xpose.msra.mxu0 0.0
    %894 = vmatprep.subr.mxu0 0.0
    %895 = vmatpush1.xpose.msra.mxu0 0.0
    %896 = vmatprep.subr.mxu0 0.0
    %897 = vmatpush1.xpose.msra.mxu0 0.0
    %898 = vmatprep.subr.mxu0 0.0
    %899 = vmatpush1.xpose.msra.mxu0 0.0
    %900 = vmatprep.subr.mxu0 0.0
    %901 = vmatpush1.xpose.msra.mxu0 0.0
    %902 = vmatprep.subr.mxu0 0.0
    %903 = vmatpush1.xpose.msra.mxu0 0.0
    %904 = vmatprep.subr.mxu0 0.0
    %905 = vmatpush1.xpose.msra.mxu0 0.0
    %906 = vmatprep.subr.mxu0 0.0
    %907 = vmatpush1.xpose.msra.mxu0 0.0
    %908 = vmatprep.subr.mxu0 0.0
    %909 = vmatpush1.xpose.msra.mxu0 0.0
    %910 = vmatprep.subr.mxu0 0.0
    %911 = vmatpush1.xpose.msra.mxu0 0.0
    %912 = vmatprep.subr.mxu0 0.0
    %913 = vmatpush1.xpose.msra.mxu0 0.0
    %914 = vmatprep.subr.mxu0 0.0
    %915 = vmatpush1.xpose.msra.mxu0 0.0
    %916 = vmatprep.subr.mxu0 0.0
    %917 = vmatpush1.xpose.msra.mxu0 0.0
    %918 = vmatprep.subr.mxu0 0.0
    %919 = vmatpush1.xpose.msra.mxu0 0.0
    %920 = vmatprep.subr.mxu0 0.0
    %921 = vmatpush1.xpose.msra.mxu0 0.0
    %922 = vmatprep.subr.mxu0 0.0
    %923 = vmatpush1.xpose.msra.mxu0 0.0
    %924 = vmatprep.subr.mxu0 0.0
    %925 = vmatpush1.xpose.msra.mxu0 0.0
    %926 = vmatprep.subr.mxu0 0.0
    %927 = vmatpush1.xpose.msra.mxu0 0.0
    %928 = vmatprep.subr.mxu0 0.0
    %929 = vmatpush1.xpose.msra.mxu0 0.0
    %930 = vmatprep.subr.mxu0 0.0
    %931 = vmatpush1.xpose.msra.mxu0 0.0
    %932 = vmatprep.subr.mxu0 0.0
    %933 = vmatpush1.xpose.msra.mxu0 0.0
    %934 = vmatprep.subr.mxu0 0.0
    %935 = vmatpush1.xpose.msra.mxu0 0.0
    %936 = vmatprep.subr.mxu0 0.0
    %937 = vmatpush1.xpose.msra.mxu0 0.0
    %938 = vmatprep.subr.mxu0 0.0
    %939 = vmatpush1.xpose.msra.mxu0 0.0
    %940 = vmatprep.subr.mxu0 0.0
    %941 = vmatpush1.xpose.msra.mxu0 0.0
    %942 = vmatprep.mubr.f32.mxu0 %v875
    %943 = vmatmul.mubr.f32.gmra.mrb[0].mxu0 %v874
    %v944 = vpop.f32.mrb[0].mxu0
    %v945 = vadd.f32 0.0, %v944
    %v946 = vpop.f32.mrb[0].mxu0
    %947 = vdwg.mxu0
    %s948 = scalar_lea.vmem [#allocation5], 128
    %v949 = vld [vmem:[%s948] sm:$0xff]
    %v950 = vld [vmem:[%s948 + $0x8] sm:$0xff]
    %v951 = vld [vmem:[%s948 + $0x10] sm:$0xff]
    %v952 = vld [vmem:[%s948 + $0x18] sm:$0xff]
    %v953 = vld [vmem:[%s948 + $0x20] sm:$0xff]
    %v954 = vld [vmem:[%s948 + $0x28] sm:$0xff]
    %v955 = vld [vmem:[%s948 + $0x30] sm:$0xff]
    %v956 = vld [vmem:[%s948 + $0x38] sm:$0xff]
    %s957 = scalar_lea.vmem [#allocation5], 192
    %v958 = vld [vmem:[%s957] sm:$0xff]
    %v959 = vld [vmem:[%s957 + $0x8] sm:$0xff]
    %v960 = vld [vmem:[%s957 + $0x10] sm:$0xff]
    %v961 = vld [vmem:[%s957 + $0x18] sm:$0xff]
    %v962 = vld [vmem:[%s957 + $0x20] sm:$0xff]
    %v963 = vld [vmem:[%s957 + $0x28] sm:$0xff]
    %v964 = vld [vmem:[%s957 + $0x30] sm:$0xff]
    %v965 = vld [vmem:[%s957 + $0x38] sm:$0xff]
    %v966 = vrot.slane %v853, 6
    %v967 = vrot.slane %v854, 6
    %970 = vmatprep.subr.mxu0 %v959
    %971 = vmatpush1.xpose.msra.mxu0 %v958
    %972 = vmatprep.subr.mxu0 %v961
    %973 = vmatpush1.xpose.msra.mxu0 %v960
    %974 = vmatprep.subr.mxu0 %v963
    %975 = vmatpush1.xpose.msra.mxu0 %v962
    %976 = vmatprep.subr.mxu0 %v965
    %977 = vmatpush1.xpose.msra.mxu0 %v964
    %978 = vmatprep.subr.mxu0 0.0
    %979 = vmatpush1.xpose.msra.mxu0 0.0
    %980 = vmatprep.subr.mxu0 0.0
    %981 = vmatpush1.xpose.msra.mxu0 0.0
    %982 = vmatprep.subr.mxu0 0.0
    %983 = vmatpush1.xpose.msra.mxu0 0.0
    %984 = vmatprep.subr.mxu0 0.0
    %985 = vmatpush1.xpose.msra.mxu0 0.0
    %986 = vmatprep.subr.mxu0 0.0
    %987 = vmatpush1.xpose.msra.mxu0 0.0
    %988 = vmatprep.subr.mxu0 0.0
    %989 = vmatpush1.xpose.msra.mxu0 0.0
    %990 = vmatprep.subr.mxu0 0.0
    %991 = vmatpush1.xpose.msra.mxu0 0.0
    %992 = vmatprep.subr.mxu0 0.0
    %993 = vmatpush1.xpose.msra.mxu0 0.0
    %994 = vmatprep.subr.mxu0 0.0
    %995 = vmatpush1.xpose.msra.mxu0 0.0
    %996 = vmatprep.subr.mxu0 0.0
    %997 = vmatpush1.xpose.msra.mxu0 0.0
    %998 = vmatprep.subr.mxu0 0.0
    %999 = vmatpush1.xpose.msra.mxu0 0.0
    %1000 = vmatprep.subr.mxu0 0.0
    %1001 = vmatpush1.xpose.msra.mxu0 0.0
    %1002 = vmatprep.subr.mxu0 0.0
    %1003 = vmatpush1.xpose.msra.mxu0 0.0
    %1004 = vmatprep.subr.mxu0 0.0
    %1005 = vmatpush1.xpose.msra.mxu0 0.0
    %1006 = vmatprep.subr.mxu0 0.0
    %1007 = vmatpush1.xpose.msra.mxu0 0.0
    %1008 = vmatprep.subr.mxu0 0.0
    %1009 = vmatpush1.xpose.msra.mxu0 0.0
    %1010 = vmatprep.subr.mxu0 0.0
    %1011 = vmatpush1.xpose.msra.mxu0 0.0
    %1012 = vmatprep.subr.mxu0 0.0
    %1013 = vmatpush1.xpose.msra.mxu0 0.0
    %1014 = vmatprep.subr.mxu0 0.0
    %1015 = vmatpush1.xpose.msra.mxu0 0.0
    %1016 = vmatprep.subr.mxu0 0.0
    %1017 = vmatpush1.xpose.msra.mxu0 0.0
    %1018 = vmatprep.subr.mxu0 0.0
    %1019 = vmatpush1.xpose.msra.mxu0 0.0
    %1020 = vmatprep.subr.mxu0 0.0
    %1021 = vmatpush1.xpose.msra.mxu0 0.0
    %1022 = vmatprep.subr.mxu0 0.0
    %1023 = vmatpush1.xpose.msra.mxu0 0.0
    %1024 = vmatprep.subr.mxu0 0.0
    %1025 = vmatpush1.xpose.msra.mxu0 0.0
    %1026 = vmatprep.subr.mxu0 0.0
    %1027 = vmatpush1.xpose.msra.mxu0 0.0
    %1028 = vmatprep.subr.mxu0 0.0
    %1029 = vmatpush1.xpose.msra.mxu0 0.0
    %1030 = vmatprep.subr.mxu0 0.0
    %1031 = vmatpush1.xpose.msra.mxu0 0.0
    %1032 = vmatprep.subr.mxu0 0.0
    %1033 = vmatpush1.xpose.msra.mxu0 0.0
    %1034 = vmatprep.mubr.f32.mxu0 %v967
    %1035 = vmatmul.mubr.f32.gmra.mrb[0].mxu0 %v966
    %v1036 = vpop.f32.mrb[0].mxu0
    %v1037 = vadd.f32 0.0, %v1036
    %v1038 = vpop.f32.mrb[0].mxu0
    %1039 = vdwg.mxu0
    %1040 = vmatprep.subr.mxu0 %v856
    %1041 = vmatpush1.xpose.msra.mxu0 %v855
    %1042 = vmatprep.subr.mxu0 %v858
    %1043 = vmatpush1.xpose.msra.mxu0 %v857
    %1044 = vmatprep.subr.mxu0 %v860
    %1045 = vmatpush1.xpose.msra.mxu0 %v859
    %1046 = vmatprep.subr.mxu0 %v862
    %1047 = vmatpush1.xpose.msra.mxu0 %v861
    %1048 = vmatprep.subr.mxu0 0.0
    %1049 = vmatpush1.xpose.msra.mxu0 0.0
    %1050 = vmatprep.subr.mxu0 0.0
    %1051 = vmatpush1.xpose.msra.mxu0 0.0
    %1052 = vmatprep.subr.mxu0 0.0
    %1053 = vmatpush1.xpose.msra.mxu0 0.0
    %1054 = vmatprep.subr.mxu0 0.0
    %1055 = vmatpush1.xpose.msra.mxu0 0.0
    %1056 = vmatprep.subr.mxu0 0.0
    %1057 = vmatpush1.xpose.msra.mxu0 0.0
    %1058 = vmatprep.subr.mxu0 0.0
    %1059 = vmatpush1.xpose.msra.mxu0 0.0
    %1060 = vmatprep.subr.mxu0 0.0
    %1061 = vmatpush1.xpose.msra.mxu0 0.0
    %1062 = vmatprep.subr.mxu0 0.0
    %1063 = vmatpush1.xpose.msra.mxu0 0.0
    %1064 = vmatprep.subr.mxu0 0.0
    %1065 = vmatpush1.xpose.msra.mxu0 0.0
    %1066 = vmatprep.subr.mxu0 0.0
    %1067 = vmatpush1.xpose.msra.mxu0 0.0
    %1068 = vmatprep.subr.mxu0 0.0
    %1069 = vmatpush1.xpose.msra.mxu0 0.0
    %1070 = vmatprep.subr.mxu0 0.0
    %1071 = vmatpush1.xpose.msra.mxu0 0.0
    %1072 = vmatprep.subr.mxu0 0.0
    %1073 = vmatpush1.xpose.msra.mxu0 0.0
    %1074 = vmatprep.subr.mxu0 0.0
    %1075 = vmatpush1.xpose.msra.mxu0 0.0
    %1076 = vmatprep.subr.mxu0 0.0
    %1077 = vmatpush1.xpose.msra.mxu0 0.0
    %1078 = vmatprep.subr.mxu0 0.0
    %1079 = vmatpush1.xpose.msra.mxu0 0.0
    %1080 = vmatprep.subr.mxu0 0.0
    %1081 = vmatpush1.xpose.msra.mxu0 0.0
    %1082 = vmatprep.subr.mxu0 0.0
    %1083 = vmatpush1.xpose.msra.mxu0 0.0
    %1084 = vmatprep.subr.mxu0 0.0
    %1085 = vmatpush1.xpose.msra.mxu0 0.0
    %1086 = vmatprep.subr.mxu0 0.0
    %1087 = vmatpush1.xpose.msra.mxu0 0.0
    %1088 = vmatprep.subr.mxu0 0.0
    %1089 = vmatpush1.xpose.msra.mxu0 0.0
    %1090 = vmatprep.subr.mxu0 0.0
    %1091 = vmatpush1.xpose.msra.mxu0 0.0
    %1092 = vmatprep.subr.mxu0 0.0
    %1093 = vmatpush1.xpose.msra.mxu0 0.0
    %1094 = vmatprep.subr.mxu0 0.0
    %1095 = vmatpush1.xpose.msra.mxu0 0.0
    %1096 = vmatprep.subr.mxu0 0.0
    %1097 = vmatpush1.xpose.msra.mxu0 0.0
    %1098 = vmatprep.subr.mxu0 0.0
    %1099 = vmatpush1.xpose.msra.mxu0 0.0
    %1100 = vmatprep.subr.mxu0 0.0
    %1101 = vmatpush1.xpose.msra.mxu0 0.0
    %1102 = vmatprep.subr.mxu0 0.0
    %1103 = vmatpush1.xpose.msra.mxu0 0.0
    %1104 = vmatprep.mubr.f32.mxu0 %v854
    %1105 = vmatmul.mubr.f32.gmra.mrb[0].mxu0 %v853
    %v1106 = vpop.f32.mrb[0].mxu0
    %v1107 = vadd.f32 %v945, %v1106
    %v1108 = vpop.f32.mrb[0].mxu0
    %1109 = vdwg.mxu0
    %v1110 = vrot.slane %v853, 4
    %v1111 = vrot.slane %v854, 4
    %1114 = vmatprep.subr.mxu0 %v950
    %1115 = vmatpush1.xpose.msra.mxu0 %v949
    %1116 = vmatprep.subr.mxu0 %v952
    %1117 = vmatpush1.xpose.msra.mxu0 %v951
    %1118 = vmatprep.subr.mxu0 %v954
    %1119 = vmatpush1.xpose.msra.mxu0 %v953
    %1120 = vmatprep.subr.mxu0 %v956
    %1121 = vmatpush1.xpose.msra.mxu0 %v955
    %1122 = vmatprep.subr.mxu0 0.0
    %1123 = vmatpush1.xpose.msra.mxu0 0.0
    %1124 = vmatprep.subr.mxu0 0.0
    %1125 = vmatpush1.xpose.msra.mxu0 0.0
    %1126 = vmatprep.subr.mxu0 0.0
    %1127 = vmatpush1.xpose.msra.mxu0 0.0
    %1128 = vmatprep.subr.mxu0 0.0
    %1129 = vmatpush1.xpose.msra.mxu0 0.0
    %1130 = vmatprep.subr.mxu0 0.0
    %1131 = vmatpush1.xpose.msra.mxu0 0.0
    %1132 = vmatprep.subr.mxu0 0.0
    %1133 = vmatpush1.xpose.msra.mxu0 0.0
    %1134 = vmatprep.subr.mxu0 0.0
    %1135 = vmatpush1.xpose.msra.mxu0 0.0
    %1136 = vmatprep.subr.mxu0 0.0
    %1137 = vmatpush1.xpose.msra.mxu0 0.0
    %1138 = vmatprep.subr.mxu0 0.0
    %1139 = vmatpush1.xpose.msra.mxu0 0.0
    %1140 = vmatprep.subr.mxu0 0.0
    %1141 = vmatpush1.xpose.msra.mxu0 0.0
    %1142 = vmatprep.subr.mxu0 0.0
    %1143 = vmatpush1.xpose.msra.mxu0 0.0
    %1144 = vmatprep.subr.mxu0 0.0
    %1145 = vmatpush1.xpose.msra.mxu0 0.0
    %1146 = vmatprep.subr.mxu0 0.0
    %1147 = vmatpush1.xpose.msra.mxu0 0.0
    %1148 = vmatprep.subr.mxu0 0.0
    %1149 = vmatpush1.xpose.msra.mxu0 0.0
    %1150 = vmatprep.subr.mxu0 0.0
    %1151 = vmatpush1.xpose.msra.mxu0 0.0
    %1152 = vmatprep.subr.mxu0 0.0
    %1153 = vmatpush1.xpose.msra.mxu0 0.0
    %1154 = vmatprep.subr.mxu0 0.0
    %1155 = vmatpush1.xpose.msra.mxu0 0.0
    %1156 = vmatprep.subr.mxu0 0.0
    %1157 = vmatpush1.xpose.msra.mxu0 0.0
    %1158 = vmatprep.subr.mxu0 0.0
    %1159 = vmatpush1.xpose.msra.mxu0 0.0
    %1160 = vmatprep.subr.mxu0 0.0
    %1161 = vmatpush1.xpose.msra.mxu0 0.0
    %1162 = vmatprep.subr.mxu0 0.0
    %1163 = vmatpush1.xpose.msra.mxu0 0.0
    %1164 = vmatprep.subr.mxu0 0.0
    %1165 = vmatpush1.xpose.msra.mxu0 0.0
    %1166 = vmatprep.subr.mxu0 0.0
    %1167 = vmatpush1.xpose.msra.mxu0 0.0
    %1168 = vmatprep.subr.mxu0 0.0
    %1169 = vmatpush1.xpose.msra.mxu0 0.0
    %1170 = vmatprep.subr.mxu0 0.0
    %1171 = vmatpush1.xpose.msra.mxu0 0.0
    %1172 = vmatprep.subr.mxu0 0.0
    %1173 = vmatpush1.xpose.msra.mxu0 0.0
    %1174 = vmatprep.subr.mxu0 0.0
    %1175 = vmatpush1.xpose.msra.mxu0 0.0
    %1176 = vmatprep.subr.mxu0 0.0
    %1177 = vmatpush1.xpose.msra.mxu0 0.0
    %1178 = vmatprep.mubr.f32.mxu0 %v1111
    %1179 = vmatmul.mubr.f32.gmra.mrb[0].mxu0 %v1110
    %v1180 = vpop.f32.mrb[0].mxu0
    %v1181 = vadd.f32 %v1037, %v1180
    %v1182 = vpop.f32.mrb[0].mxu0
    %1183 = vdwg.mxu0
    %v1184 = vadd.f32 %v1107, %v1181
    %v1185 = vld [vmem:[#allocation2 + $0x80] sm:$0x1]
    %v1186 = vlaneseq
    %v1187 = vshrl.u32 %v1186, 7
    %v1188 = vsub.s32 0, %v1187
    %v1189 = vrot.slane %v1185, %v1188
    %v1190 = vadd.f32 %v1184, %v1189
    %v1191 = vmax.f32 %v1190, 0.0
    %v1192 = vld [vmem:[%s1] sm:$0x3]
    %v1193 = vld [vmem:[#allocation2 + $0x50] sm:$0xff]
    %v1194 = vld [vmem:[#allocation2 + $0x58] sm:$0xff]
    %v1195 = vld [vmem:[#allocation2 + $0x60] sm:$0xff]
    %v1196 = vld [vmem:[#allocation2 + $0x68] sm:$0xff]
    %v1197 = vld [vmem:[#allocation2 + $0x70] sm:$0x3]
    %vm1198 = vcmask 15360
    %v1200 = vsel %vm1198, %v1192, 0
    %vm1202 = vcmask 1041408
    %v1204 = vsel %vm1202, %v1197, 0
    %1206 = vmatprep.subr.mxu0 0.0
    %1207 = vmatpush1.msra.mxu0 %v1204
    %1208 = vmatprep.subr.mxu0 0.0
    %1209 = vmatpush1.msra.mxu0 0.0
    %1210 = vmatprep.subr.mxu0 0.0
    %1211 = vmatpush1.msra.mxu0 0.0
    %1212 = vmatprep.subr.mxu0 0.0
    %1213 = vmatpush1.msra.mxu0 0.0
    %1214 = vmatprep.subr.mxu0 0.0
    %1215 = vmatpush1.msra.mxu0 0.0
    %1216 = vmatprep.subr.mxu0 0.0
    %1217 = vmatpush1.msra.mxu0 0.0
    %1218 = vmatprep.subr.mxu0 0.0
    %1219 = vmatpush1.msra.mxu0 0.0
    %1220 = vmatprep.subr.mxu0 0.0
    %1221 = vmatpush1.msra.mxu0 0.0
    %1222 = vmatprep.subr.mxu0 0.0
    %1223 = vmatpush1.msra.mxu0 0.0
    %1224 = vmatprep.subr.mxu0 0.0
    %1225 = vmatpush1.msra.mxu0 0.0
    %1226 = vmatprep.subr.mxu0 0.0
    %1227 = vmatpush1.msra.mxu0 0.0
    %1228 = vmatprep.subr.mxu0 0.0
    %1229 = vmatpush1.msra.mxu0 0.0
    %1230 = vmatprep.subr.mxu0 0.0
    %1231 = vmatpush1.msra.mxu0 0.0
    %1232 = vmatprep.subr.mxu0 0.0
    %1233 = vmatpush1.msra.mxu0 0.0
    %1234 = vmatprep.subr.mxu0 0.0
    %1235 = vmatpush1.msra.mxu0 0.0
    %1236 = vmatprep.subr.mxu0 0.0
    %1237 = vmatpush1.msra.mxu0 0.0
    %1238 = vmatprep.subr.mxu0 0.0
    %1239 = vmatpush1.msra.mxu0 0.0
    %1240 = vmatprep.subr.mxu0 0.0
    %1241 = vmatpush1.msra.mxu0 0.0
    %1242 = vmatprep.subr.mxu0 0.0
    %1243 = vmatpush1.msra.mxu0 0.0
    %1244 = vmatprep.subr.mxu0 0.0
    %1245 = vmatpush1.msra.mxu0 0.0
    %1246 = vmatprep.subr.mxu0 0.0
    %1247 = vmatpush1.msra.mxu0 0.0
    %1248 = vmatprep.subr.mxu0 0.0
    %1249 = vmatpush1.msra.mxu0 0.0
    %1250 = vmatprep.subr.mxu0 0.0
    %1251 = vmatpush1.msra.mxu0 0.0
    %1252 = vmatprep.subr.mxu0 0.0
    %1253 = vmatpush1.msra.mxu0 0.0
    %1254 = vmatprep.subr.mxu0 0.0
    %1255 = vmatpush1.msra.mxu0 0.0
    %1256 = vmatprep.subr.mxu0 0.0
    %1257 = vmatpush1.msra.mxu0 0.0
    %1258 = vmatprep.subr.mxu0 0.0
    %1259 = vmatpush1.msra.mxu0 0.0
    %1260 = vmatprep.subr.mxu0 0.0
    %1261 = vmatpush1.msra.mxu0 0.0
    %1262 = vmatprep.subr.mxu0 0.0
    %1263 = vmatpush1.msra.mxu0 0.0
    %1264 = vmatprep.subr.mxu0 0.0
    %1265 = vmatpush1.msra.mxu0 0.0
    %1266 = vmatprep.subr.mxu0 0.0
    %1267 = vmatpush1.msra.mxu0 0.0
    %1268 = vmatprep.subr.mxu0 0.0
    %1269 = vmatpush1.msra.mxu0 0.0
    %1270 = vmatprep.mubr.f32.mxu0 0.0
    %1271 = vmatmul.mubr.f32.gmra.mrb[0].mxu0 %v1200
    %v1272 = vpop.f32.mrb[0].mxu0
    %v1273 = vadd.f32 0.0, %v1272
    %v1274 = vpop.f32.mrb[0].mxu0
    %1275 = vdwg.mxu0
    %vm1276 = vcmask 261120
    %v1278 = vsel %vm1276, %v1191, 0
    %1280 = vmatprep.subr.mxu0 0.0
    %1281 = vmatpush1.msra.mxu0 %v1193
    %1282 = vmatprep.subr.mxu0 0.0
    %1283 = vmatpush1.msra.mxu0 %v1194
    %1284 = vmatprep.subr.mxu0 0.0
    %1285 = vmatpush1.msra.mxu0 %v1195
    %1286 = vmatprep.subr.mxu0 0.0
    %1287 = vmatpush1.msra.mxu0 %v1196
    %1288 = vmatprep.subr.mxu0 0.0
    %1289 = vmatpush1.msra.mxu0 0.0
    %1290 = vmatprep.subr.mxu0 0.0
    %1291 = vmatpush1.msra.mxu0 0.0
    %1292 = vmatprep.subr.mxu0 0.0
    %1293 = vmatpush1.msra.mxu0 0.0
    %1294 = vmatprep.subr.mxu0 0.0
    %1295 = vmatpush1.msra.mxu0 0.0
    %1296 = vmatprep.subr.mxu0 0.0
    %1297 = vmatpush1.msra.mxu0 0.0
    %1298 = vmatprep.subr.mxu0 0.0
    %1299 = vmatpush1.msra.mxu0 0.0
    %1300 = vmatprep.subr.mxu0 0.0
    %1301 = vmatpush1.msra.mxu0 0.0
    %1302 = vmatprep.subr.mxu0 0.0
    %1303 = vmatpush1.msra.mxu0 0.0
    %1304 = vmatprep.subr.mxu0 0.0
    %1305 = vmatpush1.msra.mxu0 0.0
    %1306 = vmatprep.subr.mxu0 0.0
    %1307 = vmatpush1.msra.mxu0 0.0
    %1308 = vmatprep.subr.mxu0 0.0
    %1309 = vmatpush1.msra.mxu0 0.0
    %1310 = vmatprep.subr.mxu0 0.0
    %1311 = vmatpush1.msra.mxu0 0.0
    %1312 = vmatprep.subr.mxu0 0.0
    %1313 = vmatpush1.msra.mxu0 0.0
    %1314 = vmatprep.subr.mxu0 0.0
    %1315 = vmatpush1.msra.mxu0 0.0
    %1316 = vmatprep.subr.mxu0 0.0
    %1317 = vmatpush1.msra.mxu0 0.0
    %1318 = vmatprep.subr.mxu0 0.0
    %1319 = vmatpush1.msra.mxu0 0.0
    %1320 = vmatprep.subr.mxu0 0.0
    %1321 = vmatpush1.msra.mxu0 0.0
    %1322 = vmatprep.subr.mxu0 0.0
    %1323 = vmatpush1.msra.mxu0 0.0
    %1324 = vmatprep.subr.mxu0 0.0
    %1325 = vmatpush1.msra.mxu0 0.0
    %1326 = vmatprep.subr.mxu0 0.0
    %1327 = vmatpush1.msra.mxu0 0.0
    %1328 = vmatprep.subr.mxu0 0.0
    %1329 = vmatpush1.msra.mxu0 0.0
    %1330 = vmatprep.subr.mxu0 0.0
    %1331 = vmatpush1.msra.mxu0 0.0
    %1332 = vmatprep.subr.mxu0 0.0
    %1333 = vmatpush1.msra.mxu0 0.0
    %1334 = vmatprep.subr.mxu0 0.0
    %1335 = vmatpush1.msra.mxu0 0.0
    %1336 = vmatprep.subr.mxu0 0.0
    %1337 = vmatpush1.msra.mxu0 0.0
    %1338 = vmatprep.subr.mxu0 0.0
    %1339 = vmatpush1.msra.mxu0 0.0
    %1340 = vmatprep.subr.mxu0 0.0
    %1341 = vmatpush1.msra.mxu0 0.0
    %1342 = vmatprep.subr.mxu0 0.0
    %1343 = vmatpush1.msra.mxu0 0.0
    %1344 = vmatprep.mubr.f32.mxu0 0.0
    %1345 = vmatmul.mubr.f32.gmra.mrb[0].mxu0 %v1278
    %v1346 = vpop.f32.mrb[0].mxu0
    %v1347 = vadd.f32 %v1273, %v1346
    %v1348 = vpop.f32.mrb[0].mxu0
    %1349 = vdwg.mxu0
    %v1350 = vld [vmem:[#allocation2 + $0x78] sm:$0x1]
    %v1351 = vlaneseq
    %v1352 = vshrl.u32 %v1351, 7
    %v1353 = vsub.s32 0, %v1352
    %v1354 = vrot.slane %v1350, %v1353
    %v1355 = vadd.f32 %v1347, %v1354
    %v1356 = vmax.f32 %v1355, 0.0
    %v1357 = vld [vmem:[#allocation2 + $0x88] sm:$0xff]
    %v1358 = vld [vmem:[#allocation2 + $0x90] sm:$0xff]
    %v1359 = vld [vmem:[#allocation2 + $0x98] sm:$0xff]
    %v1360 = vld [vmem:[#allocation2 + $0xa0] sm:$0xff]
    %v1361 = vld [vmem:[#allocation2 + $0xa8] sm:$0x1]
    %v1362 = vlaneseq
    %v1363 = vshrl.u32 %v1362, 7
    %v1364 = vsub.s32 0, %v1363
    %v1365 = vrot.slane %v1361, %v1364
    %v1367 = vsel %vm1276, %v1356, 0
    %1369 = vmatprep.subr.mxu0 0.0
    %1370 = vmatpush1.msra.mxu0 %v1357
    %1371 = vmatprep.subr.mxu0 0.0
    %1372 = vmatpush1.msra.mxu0 %v1358
    %1373 = vmatprep.subr.mxu0 0.0
    %1374 = vmatpush1.msra.mxu0 %v1359
    %1375 = vmatprep.subr.mxu0 0.0
    %1376 = vmatpush1.msra.mxu0 %v1360
    %1377 = vmatprep.subr.mxu0 0.0
    %1378 = vmatpush1.msra.mxu0 0.0
    %1379 = vmatprep.subr.mxu0 0.0
    %1380 = vmatpush1.msra.mxu0 0.0
    %1381 = vmatprep.subr.mxu0 0.0
    %1382 = vmatpush1.msra.mxu0 0.0
    %1383 = vmatprep.subr.mxu0 0.0
    %1384 = vmatpush1.msra.mxu0 0.0
    %1385 = vmatprep.subr.mxu0 0.0
    %1386 = vmatpush1.msra.mxu0 0.0
    %1387 = vmatprep.subr.mxu0 0.0
    %1388 = vmatpush1.msra.mxu0 0.0
    %1389 = vmatprep.subr.mxu0 0.0
    %1390 = vmatpush1.msra.mxu0 0.0
    %1391 = vmatprep.subr.mxu0 0.0
    %1392 = vmatpush1.msra.mxu0 0.0
    %1393 = vmatprep.subr.mxu0 0.0
    %1394 = vmatpush1.msra.mxu0 0.0
    %1395 = vmatprep.subr.mxu0 0.0
    %1396 = vmatpush1.msra.mxu0 0.0
    %1397 = vmatprep.subr.mxu0 0.0
    %1398 = vmatpush1.msra.mxu0 0.0
    %1399 = vmatprep.subr.mxu0 0.0
    %1400 = vmatpush1.msra.mxu0 0.0
    %1401 = vmatprep.subr.mxu0 0.0
    %1402 = vmatpush1.msra.mxu0 0.0
    %1403 = vmatprep.subr.mxu0 0.0
    %1404 = vmatpush1.msra.mxu0 0.0
    %1405 = vmatprep.subr.mxu0 0.0
    %1406 = vmatpush1.msra.mxu0 0.0
    %1407 = vmatprep.subr.mxu0 0.0
    %1408 = vmatpush1.msra.mxu0 0.0
    %1409 = vmatprep.subr.mxu0 0.0
    %1410 = vmatpush1.msra.mxu0 0.0
    %1411 = vmatprep.subr.mxu0 0.0
    %1412 = vmatpush1.msra.mxu0 0.0
    %1413 = vmatprep.subr.mxu0 0.0
    %1414 = vmatpush1.msra.mxu0 0.0
    %1415 = vmatprep.subr.mxu0 0.0
    %1416 = vmatpush1.msra.mxu0 0.0
    %1417 = vmatprep.subr.mxu0 0.0
    %1418 = vmatpush1.msra.mxu0 0.0
    %1419 = vmatprep.subr.mxu0 0.0
    %1420 = vmatpush1.msra.mxu0 0.0
    %1421 = vmatprep.subr.mxu0 0.0
    %1422 = vmatpush1.msra.mxu0 0.0
    %1423 = vmatprep.subr.mxu0 0.0
    %1424 = vmatpush1.msra.mxu0 0.0
    %1425 = vmatprep.subr.mxu0 0.0
    %1426 = vmatpush1.msra.mxu0 0.0
    %1427 = vmatprep.subr.mxu0 0.0
    %1428 = vmatpush1.msra.mxu0 0.0
    %1429 = vmatprep.subr.mxu0 0.0
    %1430 = vmatpush1.msra.mxu0 0.0
    %1431 = vmatprep.subr.mxu0 0.0
    %1432 = vmatpush1.msra.mxu0 0.0
    %1433 = vmatprep.mubr.f32.mxu0 0.0
    %1434 = vmatmul.mubr.f32.gmra.mrb[0].mxu0 %v1367
    %v1435 = vpop.f32.mrb[0].mxu0
    %v1436 = vadd.f32 %v1365, %v1435
    %v1437 = vpop.f32.mrb[0].mxu0
    %1438 = vdwg.mxu0
    %v1439 = vxor.u32 %v1436, 2147483648
    %v1440 = vmul.f32 %v1439, 1.442695
    %v1441 = vpow.pop %v1440
    %v1442 = vadd.f32 %v1441, 1.0
    %v1443 = vrcp.pop %v1442
    %v1444 = vmul.f32 1.0, %v1443
    %vm1445 = vcmask 17408
    %1446 = vst.msk [vmem:[#allocation7] sm:$0x3] %vm1445, %v1444
    // Predicated region
    $region26: #{incentive_conv_forward.1} parent=1 // pred_check
      _
    $region27: #{incentive_conv_forward.1} parent=1 // pred_check_branch
      %1448 = sbr.rel (0) target = $region29
    $region28: #{incentive_conv_forward.1} parent=1 // pred_region
      %s1450 = ssub.s32 32, 32
      %1451 = vsyncadd [#allocation4], %s1450
      %s1453 = sshll.u32 [#allocation7], 4
      %s1454 = int_to_ptr.vmem [resolvable:$true] %s1453
      %1456 = dma.vmem_to_hbm [thread:$0]  %s1454, 32, %s4, [#allocation4]
    $region29: #{incentive_conv_forward.1} parent=1 // pred_fallthru
      _
    // Predicated region
    $region30: #{incentive_conv_forward.1} parent=1 // pred_check
      _
    $region31: #{incentive_conv_forward.1} parent=1 // pred_check_branch
      %1458 = sbr.rel (0) target = $region33
    $region32: #{incentive_conv_forward.1} parent=1 // pred_region
      %1459 = dma.done [#allocation4], 32
    $region33: #{incentive_conv_forward.1} parent=1 // pred_fallthru
      _
    %1460 = vsyncpa [#allocation3], 1
    %1461 = vsyncpa [#allocation6], 1
    %1462 = vsyncpa [#allocation4], 1

</llo_original>
